<compile_context>
chip_gen: v5e
topology: v5e:2x2
jax: 0.10.0
libtpu: 0.0.40
codegen_flags: <defaults>
</compile_context>

<pallas_src>
import functools

import jax
import jax.numpy as jnp
from jax.experimental import pallas as pl
from jax.experimental.pallas import tpu as pltpu


def _attention_kernel(x_ref, wqkv_ref, wp_ref, bp_ref, o_ref, *, num_heads):
    x = x_ref[0]                                                 # (N, C) bf16
    N, C = x.shape
    H = num_heads
    D = C // H

    # ---- Fused QKV projection (scale pre-folded into the Q third) --------
    # Single (N, C) @ (C, 3C) MXU stream, f32 accumulation, bf16 result so the
    # largest intermediates stay half-width.
    qkv = jnp.dot(x, wqkv_ref[...],
                  preferred_element_type=jnp.float32).astype(jnp.bfloat16)   # (N, 3C)

    # ---- Head-major layout ------------------------------------------------
    # One relayout for all of q/k/v: (N, 3C) -> (3H, N, D). Thirds and heads
    # are then leading-dim slices: no lane-narrow column slicing, no masked
    # partial stores anywhere in the head dimension.
    qkv = jnp.swapaxes(qkv.reshape(N, 3 * H, D), 0, 1)           # (3H, N, D)
    q = qkv[0 * H:1 * H]                                         # (H, N, D)
    k = qkv[1 * H:2 * H]                                         # (H, N, D)
    v = qkv[2 * H:3 * H]                                         # (H, N, D)

    # ---- Batched attention over all heads ---------------------------------
    s = jnp.einsum('hqd,hkd->hqk', q, k,
                   preferred_element_type=jnp.float32)           # (H, N, N)
    s = s - jnp.max(s, axis=-1, keepdims=True)
    p = jnp.exp(s)
    denom = jnp.sum(p, axis=-1, keepdims=True)                   # (H, N, 1)

    # Unnormalized PV matmul, then normalize the (H, N, D) result instead of
    # the (H, N, N) probabilities.
    ctx = jnp.einsum('hqk,hkd->hqd', p.astype(jnp.bfloat16), v,
                     preferred_element_type=jnp.float32)         # (H, N, D)
    ctx = (ctx * pl.reciprocal(denom, approx=True)).astype(jnp.bfloat16)

    # ---- Merge heads + output projection (all in vregs, no scratch) -------
    ctx = jnp.swapaxes(ctx, 0, 1).reshape(N, C)                  # (N, C) bf16
    out = jnp.dot(ctx, wp_ref[...], preferred_element_type=jnp.float32)
    out = out + bp_ref[...].astype(jnp.float32)
    o_ref[0] = out.astype(o_ref.dtype)                           # lane-dense, once

    # TODO(synk): attn_drop / proj_drop are Dropout(0.0) -> identity; the torch
    # module's `attn_drop_activation` side-state is not materialized.
    # TODO(synk): for long sequences (N >~ 1-2K) add a query-tile grid axis with
    # a flash-style online softmax over KV tiles so only a q-tile of the (N, N)
    # scores is live (v7x 64 MiB VMEM) and the megacore gets more than B
    # parallel steps.


def attention_forward(x, qkv_w, proj_w, proj_b, num_heads):
    """x: (B, N, C); qkv_w: (3C, C); proj_w: (C, C); proj_b: (C,)."""
    B, N, C = x.shape
    D = C // num_heads
    scale = D ** (-0.5)
    out_dtype = x.dtype

    # Torch Linear computes x @ W.T; the 3C output axis is ordered [q|k|v],
    # each head-major in D-wide chunks, so the in-kernel reshape to
    # (N, 3H, D) matches the reference reshape/permute exactly.
    wt = qkv_w.T                                                   # (C, 3C)
    wqkv = jnp.concatenate([wt[:, :C] * scale, wt[:, C:]],
                           axis=1).astype(jnp.bfloat16)            # scale folded
    wp = proj_w.T.astype(jnp.bfloat16)                             # (C, C)
    bp = proj_b.reshape(1, C).astype(jnp.float32)
    xb = x.astype(jnp.bfloat16)

    # Rough per-step VMEM footprint (double-buffered x/out blocks, resident
    # bf16 weights, largest in-kernel intermediates); set the scoped limit
    # explicitly, capped below v7x's 64 MiB physical VMEM.
    out_isize = jnp.dtype(out_dtype).itemsize
    step_bytes = (2 * N * C * (2 + out_isize)          # x / out blocks (double-buffered)
                  + (3 * C * C + C * C + C) * 2 * 2    # resident bf16 weights (x2 buffers)
                  + 4 * N * C * 2                      # qkv / head-major q,k,v (bf16)
                  + 2 * num_heads * N * N * 4          # scores + probs (f32)
                  + 2 * N * C * 4)                     # ctx / out intermediates (f32)
    vmem_limit = int(min(60 * 2**20, max(32 * 2**20, 2 * step_bytes)))

    kernel = functools.partial(_attention_kernel, num_heads=num_heads)
    return pl.pallas_call(
        kernel,
        out_shape=jax.ShapeDtypeStruct((B, N, C), out_dtype),
        grid_spec=pltpu.PrefetchScalarGridSpec(
            num_scalar_prefetch=0,
            grid=(B,),
            in_specs=[
                pl.BlockSpec((1, N, C), lambda b: (b, 0, 0)),   # x (per batch)
                pl.BlockSpec((C, 3 * C), lambda b: (0, 0)),     # fused Wqkv (resident)
                pl.BlockSpec((C, C), lambda b: (0, 0)),         # Wproj (resident)
                pl.BlockSpec((1, C), lambda b: (0, 0)),         # proj bias
            ],
            out_specs=pl.BlockSpec((1, N, C), lambda b: (b, 0, 0)),
        ),
        compiler_params=pltpu.CompilerParams(
            dimension_semantics=("parallel",),
            vmem_limit_bytes=vmem_limit),
    )(xb, wqkv, wp, bp)


def attention_ref(x, qkv_w, proj_w, proj_b, num_heads):
    """Pure-JAX reference mirroring the PyTorch forward exactly (f32)."""
    B, N, C = x.shape
    D = C // num_heads
    scale = D ** (-0.5)
    qkv = x @ qkv_w.T                                            # (B, N, 3C)
    qkv = qkv.reshape(B, N, 3, num_heads, D).transpose(2, 0, 3, 1, 4)
    q, k, v = qkv[0] * scale, qkv[1], qkv[2]
    attn = jax.nn.softmax(q @ jnp.swapaxes(k, -2, -1), axis=-1)  # (B,H,N,N)
    out = (attn @ v).transpose(0, 2, 1, 3).reshape(B, N, C)
    return out @ proj_w.T + proj_b


if __name__ == "__main__":
    B, N, C, H = 2, 16, 64, 8   # batch, seq, hidden dim, heads (head_dim = 8)

    key = jax.random.PRNGKey(0)
    kx, kqkv, kpw, kpb = jax.random.split(key, 4)
    x = jax.random.normal(kx, (B, N, C), dtype=jnp.float32)
    qkv_w = jax.random.normal(kqkv, (3 * C, C), dtype=jnp.float32) * 0.05
    proj_w = jax.random.normal(kpw, (C, C), dtype=jnp.float32) * 0.05
    proj_b = jax.random.normal(kpb, (C,), dtype=jnp.float32) * 0.05

    out = attention_forward(x, qkv_w, proj_w, proj_b, H)
    out = jax.block_until_ready(out)

    ref = attention_ref(x, qkv_w, proj_w, proj_b, H)
    assert out.shape == (B, N, C)
    # bf16 MXU path vs. pure-f32 reference -> allow ~1e-2-level deviation.
    assert jnp.allclose(out, ref, atol=2e-2, rtol=2e-2), float(
        jnp.max(jnp.abs(out - ref)))

    print("KERNEL_OK")
</pallas_src>

<mosaic_0001>
module attributes {stable_mosaic.version = 11 : i64} {
  func.func @_attention_kernel(%arg0: i32, %arg1: memref<1x16x64xbf16, #tpu.memory_space<vmem>>, %arg2: memref<64x192xbf16, #tpu.memory_space<vmem>>, %arg3: memref<64x64xbf16, #tpu.memory_space<vmem>>, %arg4: memref<1x64xf32, #tpu.memory_space<vmem>>, %arg5: memref<1x16x64xf32, #tpu.memory_space<vmem>>) attributes {dimension_semantics = [#tpu.dimension_semantics<parallel>], iteration_bounds = array<i64: 2>, scalar_prefetch = 0 : i64, scratch_operands = 0 : i64, tpu.core_type = #tpu.core_type<tc>, window_params = [{transform_indices = @transform_0, window_bounds = array<i64: 1, 16, 64>}, {pipeline_mode = #tpu.pipeline_mode<synchronous>, transform_indices = @transform_1, window_bounds = array<i64: 64, 192>}, {pipeline_mode = #tpu.pipeline_mode<synchronous>, transform_indices = @transform_2, window_bounds = array<i64: 64, 64>}, {pipeline_mode = #tpu.pipeline_mode<synchronous>, transform_indices = @transform_3, window_bounds = array<i64: 1, 64>}, {transform_indices = @transform_4, window_bounds = array<i64: 1, 16, 64>}]} {
    %c0 = arith.constant 0 : index
    %c0_0 = arith.constant 0 : index
    %c0_1 = arith.constant 0 : index
    %0 = vector.load %arg1[%c0, %c0_0, %c0_1] : memref<1x16x64xbf16, #tpu.memory_space<vmem>>, vector<1x16x64xbf16>
    %1 = vector.shape_cast %0 : vector<1x16x64xbf16> to vector<16x64xbf16>
    %c0_2 = arith.constant 0 : index
    %c0_3 = arith.constant 0 : index
    %2 = vector.load %arg2[%c0_2, %c0_3] : memref<64x192xbf16, #tpu.memory_space<vmem>>, vector<64x192xbf16>
    %cst = arith.constant dense<0.000000e+00> : vector<16x192xf32>
    %3 = tpu.matmul %1, %2, %cst {dimension_numbers = #tpu.dot_dimension_numbers<[1], [0], [0], [1], [0, 0, 1, 1], [], []>} : vector<16x64xbf16>, vector<64x192xbf16>, vector<16x192xf32> -> vector<16x192xf32>
    %4 = arith.truncf %3 : vector<16x192xf32> to vector<16x192xbf16>
    %5 = vector.shape_cast %4 : vector<16x192xbf16> to vector<16x24x8xbf16>
    %6 = tpu.transpose %5, [1, 0, 2] : vector<16x24x8xbf16> -> vector<24x16x8xbf16>
    %7 = vector.extract_strided_slice %6 {offsets = [0, 0, 0], sizes = [8, 16, 8], strides = [1, 1, 1]} : vector<24x16x8xbf16> to vector<8x16x8xbf16>
    %8 = vector.extract_strided_slice %6 {offsets = [8, 0, 0], sizes = [8, 16, 8], strides = [1, 1, 1]} : vector<24x16x8xbf16> to vector<8x16x8xbf16>
    %9 = vector.extract_strided_slice %6 {offsets = [16, 0, 0], sizes = [8, 16, 8], strides = [1, 1, 1]} : vector<24x16x8xbf16> to vector<8x16x8xbf16>
    "tpu.trace_start"() <{level = 10 : i32, message = "hqd,hkd->hqk"}> : () -> ()
    %cst_4 = arith.constant dense<0.000000e+00> : vector<8x16x16xf32>
    %10 = tpu.matmul %7, %8, %cst_4 {dimension_numbers = #tpu.dot_dimension_numbers<[2], [2], [1], [1], [0, 0, 0, 1, 1, 1], [0], [0]>} : vector<8x16x8xbf16>, vector<8x16x8xbf16>, vector<8x16x16xf32> -> vector<8x16x16xf32>
    "tpu.trace_stop"() : () -> ()
    %cst_5 = arith.constant dense<0xFF800000> : vector<8x16xf32>
    %11 = vector.multi_reduction <maximumf>, %10, %cst_5 [2] : vector<8x16x16xf32> to vector<8x16xf32>
    %12 = vector.shape_cast %11 : vector<8x16xf32> to vector<8x16x1xf32>
    %13 = vector.broadcast %12 : vector<8x16x1xf32> to vector<8x16x16xf32>
    %14 = arith.subf %10, %13 : vector<8x16x16xf32>
    %15 = math.exp %14 : vector<8x16x16xf32>
    %cst_6 = arith.constant dense<0.000000e+00> : vector<8x16xf32>
    %16 = vector.multi_reduction <add>, %15, %cst_6 [2] : vector<8x16x16xf32> to vector<8x16xf32>
    %17 = vector.shape_cast %16 : vector<8x16xf32> to vector<8x16x1xf32>
    %18 = arith.truncf %15 : vector<8x16x16xf32> to vector<8x16x16xbf16>
    "tpu.trace_start"() <{level = 10 : i32, message = "hqk,hkd->hqd"}> : () -> ()
    %cst_7 = arith.constant dense<0.000000e+00> : vector<8x16x8xf32>
    %19 = tpu.matmul %18, %9, %cst_7 {dimension_numbers = #tpu.dot_dimension_numbers<[2], [1], [1], [2], [0, 0, 0, 1, 1, 2], [0], [0]>} : vector<8x16x16xbf16>, vector<8x16x8xbf16>, vector<8x16x8xf32> -> vector<8x16x8xf32>
    "tpu.trace_stop"() : () -> ()
    %20 = tpu.reciprocal %17 {approx = true} : vector<8x16x1xf32> -> vector<8x16x1xf32>
    %21 = vector.broadcast %20 : vector<8x16x1xf32> to vector<8x16x8xf32>
    %22 = arith.mulf %19, %21 : vector<8x16x8xf32>
    %23 = arith.truncf %22 : vector<8x16x8xf32> to vector<8x16x8xbf16>
    %24 = tpu.transpose %23, [1, 0, 2] : vector<8x16x8xbf16> -> vector<16x8x8xbf16>
    %25 = vector.shape_cast %24 : vector<16x8x8xbf16> to vector<16x64xbf16>
    %c0_8 = arith.constant 0 : index
    %c0_9 = arith.constant 0 : index
    %26 = vector.load %arg3[%c0_8, %c0_9] : memref<64x64xbf16, #tpu.memory_space<vmem>>, vector<64x64xbf16>
    %cst_10 = arith.constant dense<0.000000e+00> : vector<16x64xf32>
    %27 = tpu.matmul %25, %26, %cst_10 {dimension_numbers = #tpu.dot_dimension_numbers<[1], [0], [0], [1], [0, 0, 1, 1], [], []>} : vector<16x64xbf16>, vector<64x64xbf16>, vector<16x64xf32> -> vector<16x64xf32>
    %c0_11 = arith.constant 0 : index
    %c0_12 = arith.constant 0 : index
    %28 = vector.load %arg4[%c0_11, %c0_12] : memref<1x64xf32, #tpu.memory_space<vmem>>, vector<1x64xf32>
    %29 = vector.broadcast %28 : vector<1x64xf32> to vector<16x64xf32>
    %30 = arith.addf %27, %29 : vector<16x64xf32>
    %c0_13 = arith.constant 0 : index
    %c0_14 = arith.constant 0 : index
    %c0_15 = arith.constant 0 : index
    %31 = vector.load %arg5[%c0_13, %c0_14, %c0_15] : memref<1x16x64xf32, #tpu.memory_space<vmem>>, vector<1x16x64xf32>
    %32 = vector.shape_cast %31 : vector<1x16x64xf32> to vector<16x64xf32>
    %33 = vector.shape_cast %30 : vector<16x64xf32> to vector<1x16x64xf32>
    tpu.vector_store %arg5[%c0_13, %c0_14, %c0_15], %33 {strides = array<i32>} : memref<1x16x64xf32, #tpu.memory_space<vmem>>, vector<1x16x64xf32>,
    return
  }
  func.func @transform_0(%arg0: i32) -> (i32, i32, i32) {
    %c0_i32 = arith.constant 0 : i32
    %c0_i32_0 = arith.constant 0 : i32
    %c0_i32_1 = arith.constant 0 : i32
    return %arg0, %c0_i32, %c0_i32_0 : i32, i32, i32
  }
  func.func @transform_1(%arg0: i32) -> (i32, i32) {
    %c0_i32 = arith.constant 0 : i32
    %c0_i32_0 = arith.constant 0 : i32
    %c0_i32_1 = arith.constant 0 : i32
    return %c0_i32, %c0_i32_0 : i32, i32
  }
  func.func @transform_2(%arg0: i32) -> (i32, i32) {
    %c0_i32 = arith.constant 0 : i32
    %c0_i32_0 = arith.constant 0 : i32
    %c0_i32_1 = arith.constant 0 : i32
    return %c0_i32, %c0_i32_0 : i32, i32
  }
  func.func @transform_3(%arg0: i32) -> (i32, i32) {
    %c0_i32 = arith.constant 0 : i32
    %c0_i32_0 = arith.constant 0 : i32
    %c0_i32_1 = arith.constant 0 : i32
    return %c0_i32, %c0_i32_0 : i32, i32
  }
  func.func @transform_4(%arg0: i32) -> (i32, i32, i32) {
    %c0_i32 = arith.constant 0 : i32
    %c0_i32_0 = arith.constant 0 : i32
    %c0_i32_1 = arith.constant 0 : i32
    return %arg0, %c0_i32, %c0_i32_0 : i32, i32, i32
  }
}

</mosaic_0001>

<llo_original>
// kernel: tpu_custom_call.1
$region0: #{tpu_custom_call.1}
  #allocation0 [shape = 'u32[]', space=smem, size = 0x4, offset = 0x4, fixed_abs, tag = 'smem constant byte address 0x4 - core index']
  #allocation1 [shape = 'u32[72,128]{1,0:T(1,128)}', space=vmem, size = 0x9000, scoped, tag = 'internal scratch']
  %s0 = inlined_call_operand.hbm [shape: bf16[2,16,64], index: 0, kind: input, shape index: {}]
  %s1 = inlined_call_operand.hbm [shape: bf16[64,192], index: 1, kind: input, shape index: {}]
  %s2 = inlined_call_operand.hbm [shape: bf16[64,64], index: 2, kind: input, shape index: {}]
  %s3 = inlined_call_operand.vmem [shape: f32[1,64], index: 3, kind: input, shape index: {}]
  %s4 = inlined_call_operand.hbm [shape: f32[2,16,64], index: 4, kind: output, shape index: {}]
  %s5 = sld [smem:[#allocation0]]
  $region61: #{tpu_custom_call.1} parent=0
    _
  %s7 = ssub.s32 1, %s5
  %s8 = scalar_select 0, %s7, %s5
  $region1: #{tpu_custom_call.1} parent=0
    #allocation2 [shape = 'u8[8192]{0}', space=vmem, size = 0x2000, scoped, tag = 'input window, operand 0']
    #allocation3 [shape = 's32[2]{0}', space=sflag, size = 0x8, scoped, tag = 'scoped memory for tpu_custom_call.1']
    #allocation4 [shape = 's32[2]{0}', space=sflag, size = 0x8, scoped, tag = 'scoped memory for tpu_custom_call.1']
    #allocation5 [shape = 'u8[32768]{0}', space=vmem, size = 0x8000, scoped, tag = 'input window, operand 1, single buffered']
    #allocation6 [shape = 's32[1]{0}', space=sflag, size = 0x4, scoped, tag = 'scoped memory for tpu_custom_call.1']
    #allocation7 [shape = 'u8[16384]{0}', space=vmem, size = 0x4000, scoped, tag = 'input window, operand 2, single buffered']
    #allocation8 [shape = 'u8[16384]{0}', space=vmem, size = 0x4000, scoped, tag = 'output window, operand 0']
    %9 = vsyncpa [#allocation3], 0
    %s10 = scalar_lea.sflag [#allocation3], 1
    %11 = vsyncpa %s10, 0
    %12 = vsyncpa [#allocation6], 0
    %13 = vsyncpa [#allocation4], 0
    %s14 = scalar_lea.sflag [#allocation4], 1
    %15 = vsyncpa %s14, 0
    loop: start=0, step=1, limit=4
    $region2: #{tpu_custom_call.1} parent=1 // loop_pre_header
      _
    $region3: #{tpu_custom_call.1} parent=1 // loop_header
      %s17 = sphi 0, %s21
      %p18 = scmp.ge.s32.totalorder %s17, 4
      %s27 = sphi 0, %s29
      %s30 = sphi 0, %s27
      %s31 = sphi 0, %s30
      %s47 = sphi 0, %s31
      %s51 = sphi 0, %s51
      %s53 = sphi 0, %s51
      %s54 = sphi 0, %s53
      %s68 = sphi 0, %s54
      %s72 = sphi 0, %s72
      %s74 = sphi 0, %s72
      %s75 = sphi 0, %s74
      %s89 = sphi 0, %s75
      %s93 = sphi 0, %s93
      %s95 = sphi 0, %s93
      %s96 = sphi 0, %s95
      %s110 = sphi 0, %s96
      %s116 = sphi 0, %s118
      %s119 = sphi 0, %s116
      %s120 = sphi 0, %s119
      %s136 = sphi 0, %s120
    $region4: #{tpu_custom_call.1} parent=1 // loop_header_branch
      %20 = sbr.rel (%p18) target = $region8
    $region5: #{tpu_custom_call.1} parent=1 // loop_body
      %s22 = ssub.s32 %s17, 1
      %s23 = ssub.s32 %s17, 2
      %s24 = sadd.s32 %s17, 1
      %s25 = ssub.s32 %s17, %s24
      %p26 = scmp.eq.s32.totalorder %s25, 0
      %s28 = sadd.s32 %s27, 1
      %s29 = scalar_select %p26, %s27, %s28
      %p32 = pneg %p26
      %p33 = scmp.eq.s32.totalorder %s17, 1
      %p34 = por %p32, %p33
      %p35 = scmp.ne.s32.totalorder %s27, %s30
      %p36 = scmp.eq.s32.totalorder %s17, 0
      %p37 = por %p35, %p36
      %p38 = scmp.ne.s32.totalorder %s27, %s30
      %p39 = scmp.eq.s32.totalorder %s22, 1
      %p40 = por %p38, %p39
      %p41 = scmp.ne.s32.totalorder %s30, %s31
      %p42 = scmp.eq.s32.totalorder %s22, 0
      %p43 = por %p41, %p42
      %p44 = scmp.ne.s32.totalorder %s30, %s31
      %p45 = scmp.eq.s32.totalorder %s23, 1
      %p46 = por %p44, %p45
      %p48 = scmp.ne.s32.totalorder %s31, %s47
      %p49 = scmp.eq.s32.totalorder %s23, 0
      %p50 = por %p48, %p49
      %s52 = sadd.s32 %s51, 1
      %p55 = scmp.eq.s32.totalorder %s17, 1
      %p56 = scmp.ne.s32.totalorder %s51, %s53
      %p57 = scmp.eq.s32.totalorder %s17, 0
      %p58 = por %p56, %p57
      %p59 = scmp.ne.s32.totalorder %s51, %s53
      %p60 = scmp.eq.s32.totalorder %s22, 1
      %p61 = por %p59, %p60
      %p62 = scmp.ne.s32.totalorder %s53, %s54
      %p63 = scmp.eq.s32.totalorder %s22, 0
      %p64 = por %p62, %p63
      %p65 = scmp.ne.s32.totalorder %s53, %s54
      %p66 = scmp.eq.s32.totalorder %s23, 1
      %p67 = por %p65, %p66
      %p69 = scmp.ne.s32.totalorder %s54, %s68
      %p70 = scmp.eq.s32.totalorder %s23, 0
      %p71 = por %p69, %p70
      %s73 = sadd.s32 %s72, 1
      %p76 = scmp.eq.s32.totalorder %s17, 1
      %p77 = scmp.ne.s32.totalorder %s72, %s74
      %p78 = scmp.eq.s32.totalorder %s17, 0
      %p79 = por %p77, %p78
      %p80 = scmp.ne.s32.totalorder %s72, %s74
      %p81 = scmp.eq.s32.totalorder %s22, 1
      %p82 = por %p80, %p81
      %p83 = scmp.ne.s32.totalorder %s74, %s75
      %p84 = scmp.eq.s32.totalorder %s22, 0
      %p85 = por %p83, %p84
      %p86 = scmp.ne.s32.totalorder %s74, %s75
      %p87 = scmp.eq.s32.totalorder %s23, 1
      %p88 = por %p86, %p87
      %p90 = scmp.ne.s32.totalorder %s75, %s89
      %p91 = scmp.eq.s32.totalorder %s23, 0
      %p92 = por %p90, %p91
      %s94 = sadd.s32 %s93, 1
      %p97 = scmp.eq.s32.totalorder %s17, 1
      %p98 = scmp.ne.s32.totalorder %s93, %s95
      %p99 = scmp.eq.s32.totalorder %s17, 0
      %p100 = por %p98, %p99
      %p101 = scmp.ne.s32.totalorder %s93, %s95
      %p102 = scmp.eq.s32.totalorder %s22, 1
      %p103 = por %p101, %p102
      %p104 = scmp.ne.s32.totalorder %s95, %s96
      %p105 = scmp.eq.s32.totalorder %s22, 0
      %p106 = por %p104, %p105
      %p107 = scmp.ne.s32.totalorder %s95, %s96
      %p108 = scmp.eq.s32.totalorder %s23, 1
      %p109 = por %p107, %p108
      %p111 = scmp.ne.s32.totalorder %s96, %s110
      %p112 = scmp.eq.s32.totalorder %s23, 0
      %p113 = por %p111, %p112
      %s114 = ssub.s32 %s17, %s24
      %p115 = scmp.eq.s32.totalorder %s114, 0
      %s117 = sadd.s32 %s116, 1
      %s118 = scalar_select %p115, %s116, %s117
      %p121 = pneg %p115
      %p122 = scmp.eq.s32.totalorder %s17, 1
      %p123 = por %p121, %p122
      %p124 = scmp.ne.s32.totalorder %s116, %s119
      %p125 = scmp.eq.s32.totalorder %s17, 0
      %p126 = por %p124, %p125
      %p127 = scmp.ne.s32.totalorder %s116, %s119
      %p128 = scmp.eq.s32.totalorder %s22, 1
      %p129 = por %p127, %p128
      %p130 = scmp.ne.s32.totalorder %s119, %s120
      %p131 = scmp.eq.s32.totalorder %s22, 0
      %p132 = por %p130, %p131
      %p133 = scmp.ne.s32.totalorder %s119, %s120
      %p134 = scmp.eq.s32.totalorder %s23, 1
      %p135 = por %p133, %p134
      %p137 = scmp.ne.s32.totalorder %s120, %s136
      %p138 = scmp.eq.s32.totalorder %s23, 0
      %p139 = por %p137, %p138
      %p140 = scmp.le.s32.totalorder 1, %s17
      %p141 = scmp.lt.s32.totalorder %s17, 3
      %p142 = pnand %p140, %p141
      %p143 = pneg %p142
      // Predicated region
      $region9: #{tpu_custom_call.1} parent=5 // pred_check
        _
      $region10: #{tpu_custom_call.1} parent=5 // pred_check_branch
        %145 = sbr.rel (%p142) target = $region12
      $region11: #{tpu_custom_call.1} parent=5 // pred_region
        %s146 = ssub.s32 %s17, 1
        // Predicated region
        $region13: #{tpu_custom_call.1} parent=11 // pred_check
          %p147 = pneg %p64
        $region14: #{tpu_custom_call.1} parent=11 // pred_check_branch
          %149 = sbr.rel (%p147) target = $region16
        $region15: #{tpu_custom_call.1} parent=11 // pred_region
          %151 = vsyncadd [#allocation6], 0
          %s152 = sshll.u32 %s1, 4
          %s153 = int_to_ptr.hbm [resolvable:$true] %s152
          %s154 = sshll.u32 [#allocation5], 4
          %s155 = int_to_ptr.vmem [resolvable:$true] %s154
          %160 = dma.hbm_to_vmem [thread:$0]  %s153, 1024, %s155, [#allocation6], 128, 128, 8
        $region16: #{tpu_custom_call.1} parent=11 // pred_fallthru
          _
        // Predicated region
        $region17: #{tpu_custom_call.1} parent=11 // pred_check
          %p161 = pneg %p85
        $region18: #{tpu_custom_call.1} parent=11 // pred_check_branch
          %163 = sbr.rel (%p161) target = $region20
        $region19: #{tpu_custom_call.1} parent=11 // pred_region
          %165 = vsyncadd [#allocation6], 0
          %s166 = sshll.u32 %s2, 4
          %s167 = int_to_ptr.hbm [resolvable:$true] %s166
          %s168 = sshll.u32 [#allocation7], 4
          %s169 = int_to_ptr.vmem [resolvable:$true] %s168
          %174 = dma.hbm_to_vmem [thread:$0]  %s167, 512, %s169, [#allocation6], 64, 64, 4
        $region20: #{tpu_custom_call.1} parent=11 // pred_fallthru
          _
        // Predicated region
        $region21: #{tpu_custom_call.1} parent=11 // pred_check
          %p175 = pneg %p106
        $region22: #{tpu_custom_call.1} parent=11 // pred_check_branch
          %177 = sbr.rel (%p175) target = $region24
        $region23: #{tpu_custom_call.1} parent=11 // pred_region
          _
        $region24: #{tpu_custom_call.1} parent=11 // pred_fallthru
          _
      $region12: #{tpu_custom_call.1} parent=5 // pred_fallthru
        _
      %p178 = scmp.lt.s32.totalorder %s17, 2
      // Predicated region
      $region25: #{tpu_custom_call.1} parent=5 // pred_check
        %p179 = pneg %p178
      $region26: #{tpu_custom_call.1} parent=5 // pred_check_branch
        %181 = sbr.rel (%p179) target = $region28
      $region27: #{tpu_custom_call.1} parent=5 // pred_region
        // Predicated region
        $region29: #{tpu_custom_call.1} parent=27 // pred_check
          %p182 = pneg %p37
        $region30: #{tpu_custom_call.1} parent=27 // pred_check_branch
          %184 = sbr.rel (%p182) target = $region32
        $region31: #{tpu_custom_call.1} parent=27 // pred_region
          %s185 = sand.u32 %s27, 1
          %s186 = scalar_lea.sflag [#allocation3], %s185
          %s187 = sand.u32 %s27, 1
          %s188 = smul.addr %s187, 8
          %s189 = scalar_lea.vmem [#allocation2], %s188
          %191 = vsyncadd %s186, 0
          %s192 = smul.addr %s17, 2
          %s193 = smul.addr %s192, 4
          %s194 = scalar_lea.hbm %s0, %s193
          %s195 = sshll.u32 %s194, 4
          %s196 = int_to_ptr.hbm [resolvable:$true] %s195
          %s197 = sshll.u32 %s189, 4
          %s198 = int_to_ptr.vmem [resolvable:$true] %s197
          %203 = dma.hbm_to_vmem [thread:$0]  %s196, 128, %s198, %s186, 64, 64, 4
        $region32: #{tpu_custom_call.1} parent=27 // pred_fallthru
          _
      $region28: #{tpu_custom_call.1} parent=5 // pred_fallthru
        _
      %p204 = scmp.le.s32.totalorder 1, %s17
      %p205 = scmp.lt.s32.totalorder %s17, 3
      %p206 = pnand %p204, %p205
      %p207 = pneg %p206
      // Predicated region
      $region33: #{tpu_custom_call.1} parent=5 // pred_check
        _
      $region34: #{tpu_custom_call.1} parent=5 // pred_check_branch
        %209 = sbr.rel (%p206) target = $region36
      $region35: #{tpu_custom_call.1} parent=5 // pred_region
        %s210 = ssub.s32 %s17, 1
        %s211 = sand.u32 %s30, 1
        %s212 = scalar_lea.sflag [#allocation3], %s211
        %s213 = sand.u32 %s30, 1
        %s214 = smul.addr %s213, 8
        %s215 = scalar_lea.vmem [#allocation2], %s214
        // Predicated region
        $region37: #{tpu_custom_call.1} parent=35 // pred_check
          %p216 = pneg %p43
        $region38: #{tpu_custom_call.1} parent=35 // pred_check_branch
          %218 = sbr.rel (%p216) target = $region40
        $region39: #{tpu_custom_call.1} parent=35 // pred_region
          %220 = dma.done %s212, 128
        $region40: #{tpu_custom_call.1} parent=35 // pred_fallthru
          _
        // Predicated region
        $region41: #{tpu_custom_call.1} parent=35 // pred_check
          %p221 = pneg %p64
        $region42: #{tpu_custom_call.1} parent=35 // pred_check_branch
          %223 = sbr.rel (%p221) target = $region44
        $region43: #{tpu_custom_call.1} parent=35 // pred_region
          %225 = dma.done [#allocation6], 1024
        $region44: #{tpu_custom_call.1} parent=35 // pred_fallthru
          _
        // Predicated region
        $region45: #{tpu_custom_call.1} parent=35 // pred_check
          %p226 = pneg %p85
        $region46: #{tpu_custom_call.1} parent=35 // pred_check_branch
          %228 = sbr.rel (%p226) target = $region48
        $region47: #{tpu_custom_call.1} parent=35 // pred_region
          %230 = dma.done [#allocation6], 512
        $region48: #{tpu_custom_call.1} parent=35 // pred_fallthru
          _
        %s231 = sand.u32 %s30, 1
        %s232 = scalar_lea.sflag [#allocation3], %s231
        %s233 = sand.u32 %s30, 1
        %s234 = smul.addr %s233, 8
        %s235 = scalar_lea.vmem [#allocation2], %s234
        %p236 = pneg %p43
        %p237 = pneg %p40
        %p238 = pneg %p64
        %p239 = pneg %p61
        %p240 = pneg %p85
        %p241 = pneg %p82
        %p242 = pneg %p106
        %p243 = pneg %p103
        %p244 = pneg %p132
        %p245 = pneg %p129
        %s246 = sand.u32 %s119, 1
        %s247 = scalar_lea.sflag [#allocation4], %s246
        %s248 = sand.u32 %s119, 1
        %s249 = smul.addr %s248, 16
        %s250 = scalar_lea.vmem [#allocation8], %s249
        %v252 = vld [vmem:[%s215] sm:$0xf]
        %v253 = vld [vmem:[%s215 + $0x4] sm:$0xf]
        %v254 = vld [vmem:[#allocation5] sm:$0xff]
        %v255 = vld [vmem:[#allocation5 + $0x8] sm:$0xff]
        %v256 = vld [vmem:[#allocation5 + $0x10] sm:$0xff]
        %v257 = vld [vmem:[#allocation5 + $0x18] sm:$0xff]
        %v258 = vld [vmem:[#allocation5 + $0x20] sm:$0xff]
        %v259 = vld [vmem:[#allocation5 + $0x28] sm:$0xff]
        %v260 = vld [vmem:[#allocation5 + $0x30] sm:$0xff]
        %v261 = vld [vmem:[#allocation5 + $0x38] sm:$0xff]
        %v264 = vunpack.c.l.b16 %v252
        %v265 = vunpack.c.l.b16 %v253
        %v266 = vpack.c.b16 %v265, %v264
        %v275 = vunpack.c.l.b16 %v254
        %v276 = vunpack.c.h.b16 %v254
        %v277 = vunpack.c.l.b16 %v255
        %v278 = vunpack.c.h.b16 %v255
        %v279 = vunpack.c.l.b16 %v256
        %v280 = vunpack.c.h.b16 %v256
        %v281 = vunpack.c.l.b16 %v257
        %v282 = vunpack.c.h.b16 %v257
        %v283 = vunpack.c.l.b16 %v258
        %v284 = vunpack.c.h.b16 %v258
        %v285 = vunpack.c.l.b16 %v259
        %v286 = vunpack.c.h.b16 %v259
        %v287 = vunpack.c.l.b16 %v260
        %v288 = vunpack.c.h.b16 %v260
        %v289 = vunpack.c.l.b16 %v261
        %v290 = vunpack.c.h.b16 %v261
        %v291 = vpack.c.b16 %v277, %v275
        %v292 = vpack.c.b16 %v278, %v276
        %v293 = vpack.c.b16 %v281, %v279
        %v294 = vpack.c.b16 %v282, %v280
        %v295 = vpack.c.b16 %v285, %v283
        %v296 = vpack.c.b16 %v286, %v284
        %v297 = vpack.c.b16 %v289, %v287
        %v298 = vpack.c.b16 %v290, %v288
        %vm307 = vcmask 523264
        %v309 = vsel %vm307, %v266, 0
        %311 = vmatpush.bf16.msra.mxu0 0
        %312 = vmatpush.bf16.msra.mxu0 0
        %313 = vmatpush.bf16.msra.mxu0 0
        %314 = vmatpush.bf16.msra.mxu0 0
        %315 = vmatpush.bf16.msra.mxu0 %v297
        %316 = vmatpush.bf16.msra.mxu0 %v295
        %317 = vmatpush.bf16.msra.mxu0 %v293
        %318 = vmatpush.bf16.msra.mxu0 %v291
        %319 = vmatmul.bf16.gmra.mxu0 %v309
        %v320 = vpop.f32.mrf.mxu0
        %v321 = vadd.f32 0.0, %v320
        %v322 = vpop.f32.mrf.mxu0
        %v323 = vadd.f32 0.0, %v322
        %324 = vdwg.mxu0
        %325 = vmatpush.bf16.msra.mxu0 0
        %326 = vmatpush.bf16.msra.mxu0 0
        %327 = vmatpush.bf16.msra.mxu0 0
        %328 = vmatpush.bf16.msra.mxu0 0
        %329 = vmatpush.bf16.msra.mxu0 %v298
        %330 = vmatpush.bf16.msra.mxu0 %v296
        %331 = vmatpush.bf16.msra.mxu0 %v294
        %332 = vmatpush.bf16.msra.mxu0 %v292
        %333 = vmatmul.bf16.gmra.mxu0 %v309
        %v334 = vpop.f32.mrf.mxu0
        %v335 = vadd.f32 0.0, %v334
        %v336 = vpop.f32.mrf.mxu0
        %v337 = vadd.f32 0.0, %v336
        %338 = vdwg.mxu0
        %v339 = vpack.c.bf16 %v335, %v321
        %v340 = vpack.c.bf16 %v337, %v323
        %v343 = vrot.slane %v339, 4
        %v344 = vrot.slane %v340, 4
        %347 = vrot.lane.b32.xlu0 %v339, 120
        %v348 = vpop.permute.xlu0 %347
        %349 = vrot.lane.b32.xlu0 %v340, 120
        %v350 = vpop.permute.xlu0 %349
        %v351 = vrot.slane %v348, 4
        %v352 = vrot.slane %v350, 4
        %355 = vrot.lane.b32.xlu0 %v339, 112
        %v356 = vpop.permute.xlu0 %355
        %357 = vrot.lane.b32.xlu0 %v340, 112
        %v358 = vpop.permute.xlu0 %357
        %v359 = vrot.slane %v356, 4
        %v360 = vrot.slane %v358, 4
        %363 = vrot.lane.b32.xlu0 %v339, 104
        %v364 = vpop.permute.xlu0 %363
        %365 = vrot.lane.b32.xlu0 %v340, 104
        %v366 = vpop.permute.xlu0 %365
        %v367 = vrot.slane %v364, 4
        %v368 = vrot.slane %v366, 4
        %371 = vrot.lane.b32.xlu0 %v339, 96
        %v372 = vpop.permute.xlu0 %371
        %373 = vrot.lane.b32.xlu0 %v340, 96
        %v374 = vpop.permute.xlu0 %373
        %v375 = vrot.slane %v372, 4
        %v376 = vrot.slane %v374, 4
        %379 = vrot.lane.b32.xlu0 %v339, 88
        %v380 = vpop.permute.xlu0 %379
        %381 = vrot.lane.b32.xlu0 %v340, 88
        %v382 = vpop.permute.xlu0 %381
        %v383 = vrot.slane %v380, 4
        %v384 = vrot.slane %v382, 4
        %387 = vrot.lane.b32.xlu0 %v339, 80
        %v388 = vpop.permute.xlu0 %387
        %389 = vrot.lane.b32.xlu0 %v340, 80
        %v390 = vpop.permute.xlu0 %389
        %v391 = vrot.slane %v388, 4
        %v392 = vrot.slane %v390, 4
        %395 = vrot.lane.b32.xlu0 %v339, 72
        %v396 = vpop.permute.xlu0 %395
        %397 = vrot.lane.b32.xlu0 %v340, 72
        %v398 = vpop.permute.xlu0 %397
        %v399 = vrot.slane %v396, 4
        %v400 = vrot.slane %v398, 4
        %417 = vrot.lane.b32.xlu0 %v339, 64
        %v418 = vpop.permute.xlu0 %417
        %419 = vrot.lane.b32.xlu0 %v340, 64
        %v420 = vpop.permute.xlu0 %419
        %423 = vrot.lane.b32.xlu0 %v339, 56
        %v424 = vpop.permute.xlu0 %423
        %425 = vrot.lane.b32.xlu0 %v340, 56
        %v426 = vpop.permute.xlu0 %425
        %429 = vrot.lane.b32.xlu0 %v339, 48
        %v430 = vpop.permute.xlu0 %429
        %431 = vrot.lane.b32.xlu0 %v340, 48
        %v432 = vpop.permute.xlu0 %431
        %435 = vrot.lane.b32.xlu0 %v339, 40
        %v436 = vpop.permute.xlu0 %435
        %437 = vrot.lane.b32.xlu0 %v340, 40
        %v438 = vpop.permute.xlu0 %437
        %441 = vrot.lane.b32.xlu0 %v339, 32
        %v442 = vpop.permute.xlu0 %441
        %443 = vrot.lane.b32.xlu0 %v340, 32
        %v444 = vpop.permute.xlu0 %443
        %447 = vrot.lane.b32.xlu0 %v339, 24
        %v448 = vpop.permute.xlu0 %447
        %449 = vrot.lane.b32.xlu0 %v340, 24
        %v450 = vpop.permute.xlu0 %449
        %453 = vrot.lane.b32.xlu0 %v339, 16
        %v454 = vpop.permute.xlu0 %453
        %455 = vrot.lane.b32.xlu0 %v340, 16
        %v456 = vpop.permute.xlu0 %455
        %459 = vrot.lane.b32.xlu0 %v339, 8
        %v460 = vpop.permute.xlu0 %459
        %461 = vrot.lane.b32.xlu0 %v340, 8
        %v462 = vpop.permute.xlu0 %461
        %v465 = vrot.slane %v372, 4
        %vm466 = vcmask 1047556
        %v467 = vsel %vm466, %v465, %v339
        %v469 = vunpack.c.l.s4 1983009808
        %v470 = vunpack.c.0.s8 %v469
        %v471 = vperm.slane %v467, %v470
        %v472 = vrot.slane %v388, 4
        %v473 = vsel %vm466, %v472, %v356
        %v475 = vunpack.c.l.s4 1983009808
        %v476 = vunpack.c.0.s8 %v475
        %v477 = vperm.slane %v473, %v476
        %v478 = vrot.slane %v477, 4
        %v479 = vsel %vm466, %v478, %v471
        %v480 = vrot.slane %v471, 4
        %v481 = vsel %vm466, %v477, %v480
        %v483 = vunpack.c.l.s4 1934713408
        %v484 = vunpack.c.0.s8 %v483
        %v485 = vperm.slane %v479, %v484
        %v487 = vunpack.c.l.s4 1934713408
        %v488 = vunpack.c.0.s8 %v487
        %v489 = vperm.slane %v481, %v488
        %v490 = vrot.slane %v485, 4
        %v491 = vsel %vm466, 0, %v490
        %v492 = vrot.slane %v489, 4
        %v493 = vsel %vm466, 0, %v492
        %v494 = vrot.slane %v380, 4
        %v495 = vsel %vm466, %v494, %v348
        %v497 = vunpack.c.l.s4 1983009808
        %v498 = vunpack.c.0.s8 %v497
        %v499 = vperm.slane %v495, %v498
        %v500 = vrot.slane %v396, 4
        %v501 = vsel %vm466, %v500, %v364
        %v503 = vunpack.c.l.s4 1983009808
        %v504 = vunpack.c.0.s8 %v503
        %v505 = vperm.slane %v501, %v504
        %v506 = vrot.slane %v505, 4
        %v507 = vsel %vm466, %v506, %v499
        %v508 = vrot.slane %v499, 4
        %v509 = vsel %vm466, %v505, %v508
        %v511 = vunpack.c.l.s4 1934713408
        %v512 = vunpack.c.0.s8 %v511
        %v513 = vperm.slane %v507, %v512
        %v515 = vunpack.c.l.s4 1934713408
        %v516 = vunpack.c.0.s8 %v515
        %v517 = vperm.slane %v509, %v516
        %v518 = vrot.slane %v513, 4
        %v519 = vsel %vm466, 0, %v518
        %v520 = vrot.slane %v517, 4
        %v521 = vsel %vm466, 0, %v520
        %v522 = vrot.slane %v442, 4
        %v523 = vsel %vm466, %v522, %v418
        %v525 = vunpack.c.l.s4 1983009808
        %v526 = vunpack.c.0.s8 %v525
        %v527 = vperm.slane %v523, %v526
        %v528 = vrot.slane %v454, 4
        %v529 = vsel %vm466, %v528, %v430
        %v531 = vunpack.c.l.s4 1983009808
        %v532 = vunpack.c.0.s8 %v531
        %v533 = vperm.slane %v529, %v532
        %v534 = vrot.slane %v533, 4
        %v535 = vsel %vm466, %v534, %v527
        %v536 = vrot.slane %v527, 4
        %v537 = vsel %vm466, %v533, %v536
        %v539 = vunpack.c.l.s4 1934713408
        %v540 = vunpack.c.0.s8 %v539
        %v541 = vperm.slane %v535, %v540
        %v543 = vunpack.c.l.s4 1934713408
        %v544 = vunpack.c.0.s8 %v543
        %v545 = vperm.slane %v537, %v544
        %v546 = vrot.slane %v541, 4
        %v547 = vsel %vm466, 0, %v546
        %v548 = vrot.slane %v545, 4
        %v549 = vsel %vm466, 0, %v548
        %v550 = vrot.slane %v448, 4
        %v551 = vsel %vm466, %v550, %v424
        %v553 = vunpack.c.l.s4 1983009808
        %v554 = vunpack.c.0.s8 %v553
        %v555 = vperm.slane %v551, %v554
        %v556 = vrot.slane %v460, 4
        %v557 = vsel %vm466, %v556, %v436
        %v559 = vunpack.c.l.s4 1983009808
        %v560 = vunpack.c.0.s8 %v559
        %v561 = vperm.slane %v557, %v560
        %v562 = vrot.slane %v561, 4
        %v563 = vsel %vm466, %v562, %v555
        %v564 = vrot.slane %v555, 4
        %v565 = vsel %vm466, %v561, %v564
        %v567 = vunpack.c.l.s4 1934713408
        %v568 = vunpack.c.0.s8 %v567
        %v569 = vperm.slane %v563, %v568
        %v571 = vunpack.c.l.s4 1934713408
        %v572 = vunpack.c.0.s8 %v571
        %v573 = vperm.slane %v565, %v572
        %v574 = vrot.slane %v569, 4
        %v575 = vsel %vm466, 0, %v574
        %v576 = vrot.slane %v573, 4
        %v577 = vsel %vm466, 0, %v576
        %v578 = vrot.slane %v375, 4
        %v579 = vsel %vm466, %v578, %v343
        %v581 = vunpack.c.l.s4 1983009808
        %v582 = vunpack.c.0.s8 %v581
        %v583 = vperm.slane %v579, %v582
        %v584 = vrot.slane %v391, 4
        %v585 = vsel %vm466, %v584, %v359
        %v587 = vunpack.c.l.s4 1983009808
        %v588 = vunpack.c.0.s8 %v587
        %v589 = vperm.slane %v585, %v588
        %v590 = vrot.slane %v589, 4
        %v591 = vsel %vm466, %v590, %v583
        %v592 = vrot.slane %v583, 4
        %v593 = vsel %vm466, %v589, %v592
        %v595 = vunpack.c.l.s4 1934713408
        %v596 = vunpack.c.0.s8 %v595
        %v597 = vperm.slane %v591, %v596
        %v599 = vunpack.c.l.s4 1934713408
        %v600 = vunpack.c.0.s8 %v599
        %v601 = vperm.slane %v593, %v600
        %v602 = vrot.slane %v597, 4
        %v603 = vsel %vm466, 0, %v602
        %v604 = vrot.slane %v601, 4
        %v605 = vsel %vm466, 0, %v604
        %v606 = vrot.slane %v383, 4
        %v607 = vsel %vm466, %v606, %v351
        %v609 = vunpack.c.l.s4 1983009808
        %v610 = vunpack.c.0.s8 %v609
        %v611 = vperm.slane %v607, %v610
        %v612 = vrot.slane %v399, 4
        %v613 = vsel %vm466, %v612, %v367
        %v615 = vunpack.c.l.s4 1983009808
        %v616 = vunpack.c.0.s8 %v615
        %v617 = vperm.slane %v613, %v616
        %v618 = vrot.slane %v617, 4
        %v619 = vsel %vm466, %v618, %v611
        %v620 = vrot.slane %v611, 4
        %v621 = vsel %vm466, %v617, %v620
        %v623 = vunpack.c.l.s4 1934713408
        %v624 = vunpack.c.0.s8 %v623
        %v625 = vperm.slane %v619, %v624
        %v627 = vunpack.c.l.s4 1934713408
        %v628 = vunpack.c.0.s8 %v627
        %v629 = vperm.slane %v621, %v628
        %v630 = vrot.slane %v625, 4
        %v631 = vsel %vm466, 0, %v630
        %v632 = vrot.slane %v629, 4
        %v633 = vsel %vm466, 0, %v632
        %v634 = vrot.slane %v374, 4
        %v635 = vsel %vm466, %v634, %v340
        %v637 = vunpack.c.l.s4 1983009808
        %v638 = vunpack.c.0.s8 %v637
        %v639 = vperm.slane %v635, %v638
        %v640 = vrot.slane %v390, 4
        %v641 = vsel %vm466, %v640, %v358
        %v643 = vunpack.c.l.s4 1983009808
        %v644 = vunpack.c.0.s8 %v643
        %v645 = vperm.slane %v641, %v644
        %v646 = vrot.slane %v645, 4
        %v647 = vsel %vm466, %v646, %v639
        %v648 = vrot.slane %v639, 4
        %v649 = vsel %vm466, %v645, %v648
        %v651 = vunpack.c.l.s4 1934713408
        %v652 = vunpack.c.0.s8 %v651
        %v653 = vperm.slane %v647, %v652
        %v655 = vunpack.c.l.s4 1934713408
        %v656 = vunpack.c.0.s8 %v655
        %v657 = vperm.slane %v649, %v656
        %v658 = vrot.slane %v653, 4
        %v659 = vsel %vm466, 0, %v658
        %v660 = vrot.slane %v657, 4
        %v661 = vsel %vm466, 0, %v660
        %v662 = vrot.slane %v382, 4
        %v663 = vsel %vm466, %v662, %v350
        %v665 = vunpack.c.l.s4 1983009808
        %v666 = vunpack.c.0.s8 %v665
        %v667 = vperm.slane %v663, %v666
        %v668 = vrot.slane %v398, 4
        %v669 = vsel %vm466, %v668, %v366
        %v671 = vunpack.c.l.s4 1983009808
        %v672 = vunpack.c.0.s8 %v671
        %v673 = vperm.slane %v669, %v672
        %v674 = vrot.slane %v673, 4
        %v675 = vsel %vm466, %v674, %v667
        %v676 = vrot.slane %v667, 4
        %v677 = vsel %vm466, %v673, %v676
        %v679 = vunpack.c.l.s4 1934713408
        %v680 = vunpack.c.0.s8 %v679
        %v681 = vperm.slane %v675, %v680
        %v683 = vunpack.c.l.s4 1934713408
        %v684 = vunpack.c.0.s8 %v683
        %v685 = vperm.slane %v677, %v684
        %v686 = vrot.slane %v681, 4
        %v687 = vsel %vm466, 0, %v686
        %v688 = vrot.slane %v685, 4
        %v689 = vsel %vm466, 0, %v688
        %v690 = vrot.slane %v444, 4
        %v691 = vsel %vm466, %v690, %v420
        %v693 = vunpack.c.l.s4 1983009808
        %v694 = vunpack.c.0.s8 %v693
        %v695 = vperm.slane %v691, %v694
        %v696 = vrot.slane %v456, 4
        %v697 = vsel %vm466, %v696, %v432
        %v699 = vunpack.c.l.s4 1983009808
        %v700 = vunpack.c.0.s8 %v699
        %v701 = vperm.slane %v697, %v700
        %v702 = vrot.slane %v701, 4
        %v703 = vsel %vm466, %v702, %v695
        %v704 = vrot.slane %v695, 4
        %v705 = vsel %vm466, %v701, %v704
        %v707 = vunpack.c.l.s4 1934713408
        %v708 = vunpack.c.0.s8 %v707
        %v709 = vperm.slane %v703, %v708
        %v711 = vunpack.c.l.s4 1934713408
        %v712 = vunpack.c.0.s8 %v711
        %v713 = vperm.slane %v705, %v712
        %v714 = vrot.slane %v709, 4
        %v715 = vsel %vm466, 0, %v714
        %v716 = vrot.slane %v713, 4
        %v717 = vsel %vm466, 0, %v716
        %v718 = vrot.slane %v450, 4
        %v719 = vsel %vm466, %v718, %v426
        %v721 = vunpack.c.l.s4 1983009808
        %v722 = vunpack.c.0.s8 %v721
        %v723 = vperm.slane %v719, %v722
        %v724 = vrot.slane %v462, 4
        %v725 = vsel %vm466, %v724, %v438
        %v727 = vunpack.c.l.s4 1983009808
        %v728 = vunpack.c.0.s8 %v727
        %v729 = vperm.slane %v725, %v728
        %v730 = vrot.slane %v729, 4
        %v731 = vsel %vm466, %v730, %v723
        %v732 = vrot.slane %v723, 4
        %v733 = vsel %vm466, %v729, %v732
        %v735 = vunpack.c.l.s4 1934713408
        %v736 = vunpack.c.0.s8 %v735
        %v737 = vperm.slane %v731, %v736
        %v739 = vunpack.c.l.s4 1934713408
        %v740 = vunpack.c.0.s8 %v739
        %v741 = vperm.slane %v733, %v740
        %v742 = vrot.slane %v737, 4
        %v743 = vsel %vm466, 0, %v742
        %v744 = vrot.slane %v741, 4
        %v745 = vsel %vm466, 0, %v744
        %v746 = vrot.slane %v376, 4
        %v747 = vsel %vm466, %v746, %v344
        %v749 = vunpack.c.l.s4 1983009808
        %v750 = vunpack.c.0.s8 %v749
        %v751 = vperm.slane %v747, %v750
        %v752 = vrot.slane %v392, 4
        %v753 = vsel %vm466, %v752, %v360
        %v755 = vunpack.c.l.s4 1983009808
        %v756 = vunpack.c.0.s8 %v755
        %v757 = vperm.slane %v753, %v756
        %v758 = vrot.slane %v757, 4
        %v759 = vsel %vm466, %v758, %v751
        %v760 = vrot.slane %v751, 4
        %v761 = vsel %vm466, %v757, %v760
        %v763 = vunpack.c.l.s4 1934713408
        %v764 = vunpack.c.0.s8 %v763
        %v765 = vperm.slane %v759, %v764
        %v767 = vunpack.c.l.s4 1934713408
        %v768 = vunpack.c.0.s8 %v767
        %v769 = vperm.slane %v761, %v768
        %v770 = vrot.slane %v765, 4
        %v771 = vsel %vm466, 0, %v770
        %v772 = vrot.slane %v769, 4
        %v773 = vsel %vm466, 0, %v772
        %v774 = vrot.slane %v384, 4
        %v775 = vsel %vm466, %v774, %v352
        %v777 = vunpack.c.l.s4 1983009808
        %v778 = vunpack.c.0.s8 %v777
        %v779 = vperm.slane %v775, %v778
        %v780 = vrot.slane %v400, 4
        %v781 = vsel %vm466, %v780, %v368
        %v783 = vunpack.c.l.s4 1983009808
        %v784 = vunpack.c.0.s8 %v783
        %v785 = vperm.slane %v781, %v784
        %v786 = vrot.slane %v785, 4
        %v787 = vsel %vm466, %v786, %v779
        %v788 = vrot.slane %v779, 4
        %v789 = vsel %vm466, %v785, %v788
        %v791 = vunpack.c.l.s4 1934713408
        %v792 = vunpack.c.0.s8 %v791
        %v793 = vperm.slane %v787, %v792
        %v795 = vunpack.c.l.s4 1934713408
        %v796 = vunpack.c.0.s8 %v795
        %v797 = vperm.slane %v789, %v796
        %v798 = vrot.slane %v793, 4
        %v799 = vsel %vm466, 0, %v798
        %v800 = vrot.slane %v797, 4
        %v801 = vsel %vm466, 0, %v800
        %v804 = vpack.i.b16 %v513, %v485
        %v806 = vshrl.u32 %v485, 16
        %v807 = vshrl.u32 %v513, 16
        %v808 = vpack.i.b16 %v807, %v806
        %v812 = vpack.i.b16 %v519, %v491
        %v814 = vshrl.u32 %v491, 16
        %v815 = vshrl.u32 %v519, 16
        %v816 = vpack.i.b16 %v815, %v814
        %v820 = vpack.i.b16 %v517, %v489
        %v822 = vshrl.u32 %v489, 16
        %v823 = vshrl.u32 %v517, 16
        %v824 = vpack.i.b16 %v823, %v822
        %v828 = vpack.i.b16 %v521, %v493
        %v830 = vshrl.u32 %v493, 16
        %v831 = vshrl.u32 %v521, 16
        %v832 = vpack.i.b16 %v831, %v830
        %v836 = vpack.i.b16 %v681, %v653
        %v838 = vshrl.u32 %v653, 16
        %v839 = vshrl.u32 %v681, 16
        %v840 = vpack.i.b16 %v839, %v838
        %v844 = vpack.i.b16 %v687, %v659
        %v846 = vshrl.u32 %v659, 16
        %v847 = vshrl.u32 %v687, 16
        %v848 = vpack.i.b16 %v847, %v846
        %v852 = vpack.i.b16 %v685, %v657
        %v854 = vshrl.u32 %v657, 16
        %v855 = vshrl.u32 %v685, 16
        %v856 = vpack.i.b16 %v855, %v854
        %v860 = vpack.i.b16 %v689, %v661
        %v862 = vshrl.u32 %v661, 16
        %v863 = vshrl.u32 %v689, 16
        %v864 = vpack.i.b16 %v863, %v862
        %v868 = vpack.i.b16 %v569, %v541
        %v870 = vshrl.u32 %v541, 16
        %v871 = vshrl.u32 %v569, 16
        %v872 = vpack.i.b16 %v871, %v870
        %v876 = vpack.i.b16 %v575, %v547
        %v878 = vshrl.u32 %v547, 16
        %v879 = vshrl.u32 %v575, 16
        %v880 = vpack.i.b16 %v879, %v878
        %v884 = vpack.i.b16 %v573, %v545
        %v886 = vshrl.u32 %v545, 16
        %v887 = vshrl.u32 %v573, 16
        %v888 = vpack.i.b16 %v887, %v886
        %v892 = vpack.i.b16 %v577, %v549
        %v894 = vshrl.u32 %v549, 16
        %v895 = vshrl.u32 %v577, 16
        %v896 = vpack.i.b16 %v895, %v894
        %v900 = vpack.i.b16 %v737, %v709
        %v902 = vshrl.u32 %v709, 16
        %v903 = vshrl.u32 %v737, 16
        %v904 = vpack.i.b16 %v903, %v902
        %v908 = vpack.i.b16 %v743, %v715
        %v910 = vshrl.u32 %v715, 16
        %v911 = vshrl.u32 %v743, 16
        %v912 = vpack.i.b16 %v911, %v910
        %v916 = vpack.i.b16 %v741, %v713
        %v918 = vshrl.u32 %v713, 16
        %v919 = vshrl.u32 %v741, 16
        %v920 = vpack.i.b16 %v919, %v918
        %v924 = vpack.i.b16 %v745, %v717
        %v926 = vshrl.u32 %v717, 16
        %v927 = vshrl.u32 %v745, 16
        %v928 = vpack.i.b16 %v927, %v926
        %v932 = vpack.i.b16 %v625, %v597
        %v934 = vshrl.u32 %v597, 16
        %v935 = vshrl.u32 %v625, 16
        %v936 = vpack.i.b16 %v935, %v934
        %v940 = vpack.i.b16 %v631, %v603
        %v942 = vshrl.u32 %v603, 16
        %v943 = vshrl.u32 %v631, 16
        %v944 = vpack.i.b16 %v943, %v942
        %v948 = vpack.i.b16 %v629, %v601
        %v950 = vshrl.u32 %v601, 16
        %v951 = vshrl.u32 %v629, 16
        %v952 = vpack.i.b16 %v951, %v950
        %v956 = vpack.i.b16 %v633, %v605
        %v958 = vshrl.u32 %v605, 16
        %v959 = vshrl.u32 %v633, 16
        %v960 = vpack.i.b16 %v959, %v958
        %v964 = vpack.i.b16 %v793, %v765
        %v966 = vshrl.u32 %v765, 16
        %v967 = vshrl.u32 %v793, 16
        %v968 = vpack.i.b16 %v967, %v966
        %v972 = vpack.i.b16 %v799, %v771
        %v974 = vshrl.u32 %v771, 16
        %v975 = vshrl.u32 %v799, 16
        %v976 = vpack.i.b16 %v975, %v974
        %v980 = vpack.i.b16 %v797, %v769
        %v982 = vshrl.u32 %v769, 16
        %v983 = vshrl.u32 %v797, 16
        %v984 = vpack.i.b16 %v983, %v982
        %v988 = vpack.i.b16 %v801, %v773
        %v990 = vshrl.u32 %v773, 16
        %v991 = vshrl.u32 %v801, 16
        %v992 = vpack.i.b16 %v991, %v990
        %v994 = vrot.slane %v820, 4
        %v995 = vsel %vm466, %v994, %v804
        %v997 = vunpack.c.l.s4 1983009808
        %v998 = vunpack.c.0.s8 %v997
        %v999 = vperm.slane %v995, %v998
        %v1000 = vrot.slane %v828, 4
        %v1001 = vsel %vm466, %v1000, %v812
        %v1003 = vunpack.c.l.s4 1983009808
        %v1004 = vunpack.c.0.s8 %v1003
        %v1005 = vperm.slane %v1001, %v1004
        %v1006 = vrot.slane %v1005, 4
        %v1007 = vsel %vm466, %v1006, %v999
        %v1008 = vrot.slane %v999, 4
        %v1009 = vsel %vm466, %v1005, %v1008
        %v1011 = vunpack.c.l.s4 1934713408
        %v1012 = vunpack.c.0.s8 %v1011
        %v1013 = vperm.slane %v1007, %v1012
        %v1015 = vunpack.c.l.s4 1934713408
        %v1016 = vunpack.c.0.s8 %v1015
        %v1017 = vperm.slane %v1009, %v1016
        %v1018 = vrot.slane %v1013, 4
        %v1019 = vsel %vm466, 0, %v1018
        %v1020 = vrot.slane %v1017, 4
        %v1021 = vsel %vm466, 0, %v1020
        %v1022 = vrot.slane %v824, 4
        %v1023 = vsel %vm466, %v1022, %v808
        %v1025 = vunpack.c.l.s4 1983009808
        %v1026 = vunpack.c.0.s8 %v1025
        %v1027 = vperm.slane %v1023, %v1026
        %v1028 = vrot.slane %v832, 4
        %v1029 = vsel %vm466, %v1028, %v816
        %v1031 = vunpack.c.l.s4 1983009808
        %v1032 = vunpack.c.0.s8 %v1031
        %v1033 = vperm.slane %v1029, %v1032
        %v1034 = vrot.slane %v1033, 4
        %v1035 = vsel %vm466, %v1034, %v1027
        %v1036 = vrot.slane %v1027, 4
        %v1037 = vsel %vm466, %v1033, %v1036
        %v1039 = vunpack.c.l.s4 1934713408
        %v1040 = vunpack.c.0.s8 %v1039
        %v1041 = vperm.slane %v1035, %v1040
        %v1043 = vunpack.c.l.s4 1934713408
        %v1044 = vunpack.c.0.s8 %v1043
        %v1045 = vperm.slane %v1037, %v1044
        %v1046 = vrot.slane %v1041, 4
        %v1047 = vsel %vm466, 0, %v1046
        %v1048 = vrot.slane %v1045, 4
        %v1049 = vsel %vm466, 0, %v1048
        %v1050 = vrot.slane %v852, 4
        %v1051 = vsel %vm466, %v1050, %v836
        %v1053 = vunpack.c.l.s4 1983009808
        %v1054 = vunpack.c.0.s8 %v1053
        %v1055 = vperm.slane %v1051, %v1054
        %v1056 = vrot.slane %v860, 4
        %v1057 = vsel %vm466, %v1056, %v844
        %v1059 = vunpack.c.l.s4 1983009808
        %v1060 = vunpack.c.0.s8 %v1059
        %v1061 = vperm.slane %v1057, %v1060
        %v1062 = vrot.slane %v1061, 4
        %v1063 = vsel %vm466, %v1062, %v1055
        %v1064 = vrot.slane %v1055, 4
        %v1065 = vsel %vm466, %v1061, %v1064
        %v1067 = vunpack.c.l.s4 1934713408
        %v1068 = vunpack.c.0.s8 %v1067
        %v1069 = vperm.slane %v1063, %v1068
        %v1071 = vunpack.c.l.s4 1934713408
        %v1072 = vunpack.c.0.s8 %v1071
        %v1073 = vperm.slane %v1065, %v1072
        %v1074 = vrot.slane %v1069, 4
        %v1075 = vsel %vm466, 0, %v1074
        %v1076 = vrot.slane %v1073, 4
        %v1077 = vsel %vm466, 0, %v1076
        %v1078 = vrot.slane %v856, 4
        %v1079 = vsel %vm466, %v1078, %v840
        %v1081 = vunpack.c.l.s4 1983009808
        %v1082 = vunpack.c.0.s8 %v1081
        %v1083 = vperm.slane %v1079, %v1082
        %v1084 = vrot.slane %v864, 4
        %v1085 = vsel %vm466, %v1084, %v848
        %v1087 = vunpack.c.l.s4 1983009808
        %v1088 = vunpack.c.0.s8 %v1087
        %v1089 = vperm.slane %v1085, %v1088
        %v1090 = vrot.slane %v1089, 4
        %v1091 = vsel %vm466, %v1090, %v1083
        %v1092 = vrot.slane %v1083, 4
        %v1093 = vsel %vm466, %v1089, %v1092
        %v1095 = vunpack.c.l.s4 1934713408
        %v1096 = vunpack.c.0.s8 %v1095
        %v1097 = vperm.slane %v1091, %v1096
        %v1099 = vunpack.c.l.s4 1934713408
        %v1100 = vunpack.c.0.s8 %v1099
        %v1101 = vperm.slane %v1093, %v1100
        %v1102 = vrot.slane %v1097, 4
        %v1103 = vsel %vm466, 0, %v1102
        %v1104 = vrot.slane %v1101, 4
        %v1105 = vsel %vm466, 0, %v1104
        %v1106 = vrot.slane %v884, 4
        %v1107 = vsel %vm466, %v1106, %v868
        %v1109 = vunpack.c.l.s4 1983009808
        %v1110 = vunpack.c.0.s8 %v1109
        %v1111 = vperm.slane %v1107, %v1110
        %v1112 = vrot.slane %v892, 4
        %v1113 = vsel %vm466, %v1112, %v876
        %v1115 = vunpack.c.l.s4 1983009808
        %v1116 = vunpack.c.0.s8 %v1115
        %v1117 = vperm.slane %v1113, %v1116
        %v1118 = vrot.slane %v1117, 4
        %v1119 = vsel %vm466, %v1118, %v1111
        %v1120 = vrot.slane %v1111, 4
        %v1121 = vsel %vm466, %v1117, %v1120
        %v1123 = vunpack.c.l.s4 1934713408
        %v1124 = vunpack.c.0.s8 %v1123
        %v1125 = vperm.slane %v1119, %v1124
        %v1127 = vunpack.c.l.s4 1934713408
        %v1128 = vunpack.c.0.s8 %v1127
        %v1129 = vperm.slane %v1121, %v1128
        %v1130 = vrot.slane %v1125, 4
        %v1131 = vsel %vm466, 0, %v1130
        %v1132 = vrot.slane %v1129, 4
        %v1133 = vsel %vm466, 0, %v1132
        %v1134 = vrot.slane %v888, 4
        %v1135 = vsel %vm466, %v1134, %v872
        %v1137 = vunpack.c.l.s4 1983009808
        %v1138 = vunpack.c.0.s8 %v1137
        %v1139 = vperm.slane %v1135, %v1138
        %v1140 = vrot.slane %v896, 4
        %v1141 = vsel %vm466, %v1140, %v880
        %v1143 = vunpack.c.l.s4 1983009808
        %v1144 = vunpack.c.0.s8 %v1143
        %v1145 = vperm.slane %v1141, %v1144
        %v1146 = vrot.slane %v1145, 4
        %v1147 = vsel %vm466, %v1146, %v1139
        %v1148 = vrot.slane %v1139, 4
        %v1149 = vsel %vm466, %v1145, %v1148
        %v1151 = vunpack.c.l.s4 1934713408
        %v1152 = vunpack.c.0.s8 %v1151
        %v1153 = vperm.slane %v1147, %v1152
        %v1155 = vunpack.c.l.s4 1934713408
        %v1156 = vunpack.c.0.s8 %v1155
        %v1157 = vperm.slane %v1149, %v1156
        %v1158 = vrot.slane %v1153, 4
        %v1159 = vsel %vm466, 0, %v1158
        %v1160 = vrot.slane %v1157, 4
        %v1161 = vsel %vm466, 0, %v1160
        %v1162 = vrot.slane %v916, 4
        %v1163 = vsel %vm466, %v1162, %v900
        %v1165 = vunpack.c.l.s4 1983009808
        %v1166 = vunpack.c.0.s8 %v1165
        %v1167 = vperm.slane %v1163, %v1166
        %v1168 = vrot.slane %v924, 4
        %v1169 = vsel %vm466, %v1168, %v908
        %v1171 = vunpack.c.l.s4 1983009808
        %v1172 = vunpack.c.0.s8 %v1171
        %v1173 = vperm.slane %v1169, %v1172
        %v1174 = vrot.slane %v1173, 4
        %v1175 = vsel %vm466, %v1174, %v1167
        %v1176 = vrot.slane %v1167, 4
        %v1177 = vsel %vm466, %v1173, %v1176
        %v1179 = vunpack.c.l.s4 1934713408
        %v1180 = vunpack.c.0.s8 %v1179
        %v1181 = vperm.slane %v1175, %v1180
        %v1183 = vunpack.c.l.s4 1934713408
        %v1184 = vunpack.c.0.s8 %v1183
        %v1185 = vperm.slane %v1177, %v1184
        %v1186 = vrot.slane %v1181, 4
        %v1187 = vsel %vm466, 0, %v1186
        %v1188 = vrot.slane %v1185, 4
        %v1189 = vsel %vm466, 0, %v1188
        %v1190 = vrot.slane %v920, 4
        %v1191 = vsel %vm466, %v1190, %v904
        %v1193 = vunpack.c.l.s4 1983009808
        %v1194 = vunpack.c.0.s8 %v1193
        %v1195 = vperm.slane %v1191, %v1194
        %v1196 = vrot.slane %v928, 4
        %v1197 = vsel %vm466, %v1196, %v912
        %v1199 = vunpack.c.l.s4 1983009808
        %v1200 = vunpack.c.0.s8 %v1199
        %v1201 = vperm.slane %v1197, %v1200
        %v1202 = vrot.slane %v1201, 4
        %v1203 = vsel %vm466, %v1202, %v1195
        %v1204 = vrot.slane %v1195, 4
        %v1205 = vsel %vm466, %v1201, %v1204
        %v1207 = vunpack.c.l.s4 1934713408
        %v1208 = vunpack.c.0.s8 %v1207
        %v1209 = vperm.slane %v1203, %v1208
        %v1211 = vunpack.c.l.s4 1934713408
        %v1212 = vunpack.c.0.s8 %v1211
        %v1213 = vperm.slane %v1205, %v1212
        %v1214 = vrot.slane %v1209, 4
        %v1215 = vsel %vm466, 0, %v1214
        %v1216 = vrot.slane %v1213, 4
        %v1217 = vsel %vm466, 0, %v1216
        %v1218 = vrot.slane %v948, 4
        %v1219 = vsel %vm466, %v1218, %v932
        %v1221 = vunpack.c.l.s4 1983009808
        %v1222 = vunpack.c.0.s8 %v1221
        %v1223 = vperm.slane %v1219, %v1222
        %v1224 = vrot.slane %v956, 4
        %v1225 = vsel %vm466, %v1224, %v940
        %v1227 = vunpack.c.l.s4 1983009808
        %v1228 = vunpack.c.0.s8 %v1227
        %v1229 = vperm.slane %v1225, %v1228
        %v1230 = vrot.slane %v1229, 4
        %v1231 = vsel %vm466, %v1230, %v1223
        %v1232 = vrot.slane %v1223, 4
        %v1233 = vsel %vm466, %v1229, %v1232
        %v1235 = vunpack.c.l.s4 1934713408
        %v1236 = vunpack.c.0.s8 %v1235
        %v1237 = vperm.slane %v1231, %v1236
        %v1239 = vunpack.c.l.s4 1934713408
        %v1240 = vunpack.c.0.s8 %v1239
        %v1241 = vperm.slane %v1233, %v1240
        %v1242 = vrot.slane %v1237, 4
        %v1243 = vsel %vm466, 0, %v1242
        %v1244 = vrot.slane %v1241, 4
        %v1245 = vsel %vm466, 0, %v1244
        %v1246 = vrot.slane %v952, 4
        %v1247 = vsel %vm466, %v1246, %v936
        %v1249 = vunpack.c.l.s4 1983009808
        %v1250 = vunpack.c.0.s8 %v1249
        %v1251 = vperm.slane %v1247, %v1250
        %v1252 = vrot.slane %v960, 4
        %v1253 = vsel %vm466, %v1252, %v944
        %v1255 = vunpack.c.l.s4 1983009808
        %v1256 = vunpack.c.0.s8 %v1255
        %v1257 = vperm.slane %v1253, %v1256
        %v1258 = vrot.slane %v1257, 4
        %v1259 = vsel %vm466, %v1258, %v1251
        %v1260 = vrot.slane %v1251, 4
        %v1261 = vsel %vm466, %v1257, %v1260
        %v1263 = vunpack.c.l.s4 1934713408
        %v1264 = vunpack.c.0.s8 %v1263
        %v1265 = vperm.slane %v1259, %v1264
        %v1267 = vunpack.c.l.s4 1934713408
        %v1268 = vunpack.c.0.s8 %v1267
        %v1269 = vperm.slane %v1261, %v1268
        %v1270 = vrot.slane %v1265, 4
        %v1271 = vsel %vm466, 0, %v1270
        %v1272 = vrot.slane %v1269, 4
        %v1273 = vsel %vm466, 0, %v1272
        %v1274 = vrot.slane %v980, 4
        %v1275 = vsel %vm466, %v1274, %v964
        %v1277 = vunpack.c.l.s4 1983009808
        %v1278 = vunpack.c.0.s8 %v1277
        %v1279 = vperm.slane %v1275, %v1278
        %v1280 = vrot.slane %v988, 4
        %v1281 = vsel %vm466, %v1280, %v972
        %v1283 = vunpack.c.l.s4 1983009808
        %v1284 = vunpack.c.0.s8 %v1283
        %v1285 = vperm.slane %v1281, %v1284
        %v1286 = vrot.slane %v1285, 4
        %v1287 = vsel %vm466, %v1286, %v1279
        %v1288 = vrot.slane %v1279, 4
        %v1289 = vsel %vm466, %v1285, %v1288
        %v1291 = vunpack.c.l.s4 1934713408
        %v1292 = vunpack.c.0.s8 %v1291
        %v1293 = vperm.slane %v1287, %v1292
        %v1295 = vunpack.c.l.s4 1934713408
        %v1296 = vunpack.c.0.s8 %v1295
        %v1297 = vperm.slane %v1289, %v1296
        %v1298 = vrot.slane %v1293, 4
        %v1299 = vsel %vm466, 0, %v1298
        %v1300 = vrot.slane %v1297, 4
        %v1301 = vsel %vm466, 0, %v1300
        %v1302 = vrot.slane %v984, 4
        %v1303 = vsel %vm466, %v1302, %v968
        %v1305 = vunpack.c.l.s4 1983009808
        %v1306 = vunpack.c.0.s8 %v1305
        %v1307 = vperm.slane %v1303, %v1306
        %v1308 = vrot.slane %v992, 4
        %v1309 = vsel %vm466, %v1308, %v976
        %v1311 = vunpack.c.l.s4 1983009808
        %v1312 = vunpack.c.0.s8 %v1311
        %v1313 = vperm.slane %v1309, %v1312
        %v1314 = vrot.slane %v1313, 4
        %v1315 = vsel %vm466, %v1314, %v1307
        %v1316 = vrot.slane %v1307, 4
        %v1317 = vsel %vm466, %v1313, %v1316
        %v1319 = vunpack.c.l.s4 1934713408
        %v1320 = vunpack.c.0.s8 %v1319
        %v1321 = vperm.slane %v1315, %v1320
        %v1323 = vunpack.c.l.s4 1934713408
        %v1324 = vunpack.c.0.s8 %v1323
        %v1325 = vperm.slane %v1317, %v1324
        %v1326 = vrot.slane %v1321, 4
        %v1327 = vsel %vm466, 0, %v1326
        %v1328 = vrot.slane %v1325, 4
        %v1329 = vsel %vm466, 0, %v1328
        %v1332 = vpack.i.b16 %v1041, %v1013
        %v1333 = vshrl.u32 %v1013, 16
        %v1334 = vshrl.u32 %v1041, 16
        %v1335 = vpack.i.b16 %v1334, %v1333
        %v1338 = vpack.i.b16 %v1047, %v1019
        %v1339 = vshrl.u32 %v1019, 16
        %v1340 = vshrl.u32 %v1047, 16
        %v1341 = vpack.i.b16 %v1340, %v1339
        %v1344 = vpack.i.b16 %v1045, %v1017
        %v1345 = vshrl.u32 %v1017, 16
        %v1346 = vshrl.u32 %v1045, 16
        %v1347 = vpack.i.b16 %v1346, %v1345
        %v1350 = vpack.i.b16 %v1049, %v1021
        %v1351 = vshrl.u32 %v1021, 16
        %v1352 = vshrl.u32 %v1049, 16
        %v1353 = vpack.i.b16 %v1352, %v1351
        %v1356 = vpack.i.b16 %v1153, %v1125
        %v1357 = vshrl.u32 %v1125, 16
        %v1358 = vshrl.u32 %v1153, 16
        %v1359 = vpack.i.b16 %v1358, %v1357
        %v1362 = vpack.i.b16 %v1159, %v1131
        %v1363 = vshrl.u32 %v1131, 16
        %v1364 = vshrl.u32 %v1159, 16
        %v1365 = vpack.i.b16 %v1364, %v1363
        %v1368 = vpack.i.b16 %v1157, %v1129
        %v1369 = vshrl.u32 %v1129, 16
        %v1370 = vshrl.u32 %v1157, 16
        %v1371 = vpack.i.b16 %v1370, %v1369
        %v1374 = vpack.i.b16 %v1161, %v1133
        %v1375 = vshrl.u32 %v1133, 16
        %v1376 = vshrl.u32 %v1161, 16
        %v1377 = vpack.i.b16 %v1376, %v1375
        %v1380 = vpack.i.b16 %v1265, %v1237
        %v1381 = vshrl.u32 %v1237, 16
        %v1382 = vshrl.u32 %v1265, 16
        %v1383 = vpack.i.b16 %v1382, %v1381
        %v1386 = vpack.i.b16 %v1271, %v1243
        %v1387 = vshrl.u32 %v1243, 16
        %v1388 = vshrl.u32 %v1271, 16
        %v1389 = vpack.i.b16 %v1388, %v1387
        %v1392 = vpack.i.b16 %v1269, %v1241
        %v1393 = vshrl.u32 %v1241, 16
        %v1394 = vshrl.u32 %v1269, 16
        %v1395 = vpack.i.b16 %v1394, %v1393
        %v1398 = vpack.i.b16 %v1273, %v1245
        %v1399 = vshrl.u32 %v1245, 16
        %v1400 = vshrl.u32 %v1273, 16
        %v1401 = vpack.i.b16 %v1400, %v1399
        %v1404 = vpack.i.b16 %v1097, %v1069
        %v1405 = vshrl.u32 %v1069, 16
        %v1406 = vshrl.u32 %v1097, 16
        %v1407 = vpack.i.b16 %v1406, %v1405
        %v1410 = vpack.i.b16 %v1103, %v1075
        %v1411 = vshrl.u32 %v1075, 16
        %v1412 = vshrl.u32 %v1103, 16
        %v1413 = vpack.i.b16 %v1412, %v1411
        %v1416 = vpack.i.b16 %v1101, %v1073
        %v1417 = vshrl.u32 %v1073, 16
        %v1418 = vshrl.u32 %v1101, 16
        %v1419 = vpack.i.b16 %v1418, %v1417
        %v1422 = vpack.i.b16 %v1105, %v1077
        %v1423 = vshrl.u32 %v1077, 16
        %v1424 = vshrl.u32 %v1105, 16
        %v1425 = vpack.i.b16 %v1424, %v1423
        %v1428 = vpack.i.b16 %v1209, %v1181
        %v1429 = vshrl.u32 %v1181, 16
        %v1430 = vshrl.u32 %v1209, 16
        %v1431 = vpack.i.b16 %v1430, %v1429
        %v1434 = vpack.i.b16 %v1215, %v1187
        %v1435 = vshrl.u32 %v1187, 16
        %v1436 = vshrl.u32 %v1215, 16
        %v1437 = vpack.i.b16 %v1436, %v1435
        %v1440 = vpack.i.b16 %v1213, %v1185
        %v1441 = vshrl.u32 %v1185, 16
        %v1442 = vshrl.u32 %v1213, 16
        %v1443 = vpack.i.b16 %v1442, %v1441
        %v1446 = vpack.i.b16 %v1217, %v1189
        %v1447 = vshrl.u32 %v1189, 16
        %v1448 = vshrl.u32 %v1217, 16
        %v1449 = vpack.i.b16 %v1448, %v1447
        %v1452 = vpack.i.b16 %v1321, %v1293
        %v1453 = vshrl.u32 %v1293, 16
        %v1454 = vshrl.u32 %v1321, 16
        %v1455 = vpack.i.b16 %v1454, %v1453
        %v1458 = vpack.i.b16 %v1327, %v1299
        %v1459 = vshrl.u32 %v1299, 16
        %v1460 = vshrl.u32 %v1327, 16
        %v1461 = vpack.i.b16 %v1460, %v1459
        %v1464 = vpack.i.b16 %v1325, %v1297
        %v1465 = vshrl.u32 %v1297, 16
        %v1466 = vshrl.u32 %v1325, 16
        %v1467 = vpack.i.b16 %v1466, %v1465
        %v1470 = vpack.i.b16 %v1329, %v1301
        %v1471 = vshrl.u32 %v1301, 16
        %v1472 = vshrl.u32 %v1329, 16
        %v1473 = vpack.i.b16 %v1472, %v1471
        %v1474 = vunpack.c.l.b16 %v1332
        %v1475 = vunpack.c.l.b16 %v1404
        %v1476 = vpack.c.b16 %v1475, %v1474
        %v1477 = vunpack.c.l.b16 %v1356
        %v1478 = vunpack.c.l.b16 %v1428
        %v1479 = vpack.c.b16 %v1478, %v1477
        %vm1480 = vcmask 64512
        %v1482 = vsel %vm1480, %v1476, 0
        %v1485 = vsel %vm1480, %v1479, 0
        %1487 = vmatpush.bf16.xpose.msra.mxu0 0
        %1488 = vmatpush.bf16.xpose.msra.mxu0 0
        %1489 = vmatpush.bf16.xpose.msra.mxu0 0
        %1490 = vmatpush.bf16.xpose.msra.mxu0 0
        %1491 = vmatpush.bf16.xpose.msra.mxu0 0
        %1492 = vmatpush.bf16.xpose.msra.mxu0 0
        %1493 = vmatpush.bf16.xpose.msra.mxu0 0
        %1494 = vmatpush.bf16.xpose.msra.mxu0 %v1485
        %1495 = vmatmul.bf16.gmra.mxu0 %v1482
        %v1496 = vpop.f32.mrf.mxu0
        %v1497 = vadd.f32 0.0, %v1496
        %v1498 = vpop.f32.mrf.mxu0
        %v1499 = vadd.f32 0.0, %v1498
        %1500 = vdwg.mxu0
        %v1501 = vunpack.c.l.b16 %v1335
        %v1502 = vunpack.c.l.b16 %v1407
        %v1503 = vpack.c.b16 %v1502, %v1501
        %v1504 = vunpack.c.l.b16 %v1359
        %v1505 = vunpack.c.l.b16 %v1431
        %v1506 = vpack.c.b16 %v1505, %v1504
        %v1508 = vsel %vm1480, %v1503, 0
        %v1511 = vsel %vm1480, %v1506, 0
        %1513 = vmatpush.bf16.xpose.msra.mxu0 0
        %1514 = vmatpush.bf16.xpose.msra.mxu0 0
        %1515 = vmatpush.bf16.xpose.msra.mxu0 0
        %1516 = vmatpush.bf16.xpose.msra.mxu0 0
        %1517 = vmatpush.bf16.xpose.msra.mxu0 0
        %1518 = vmatpush.bf16.xpose.msra.mxu0 0
        %1519 = vmatpush.bf16.xpose.msra.mxu0 0
        %1520 = vmatpush.bf16.xpose.msra.mxu0 %v1511
        %1521 = vmatmul.bf16.gmra.mxu0 %v1508
        %v1522 = vpop.f32.mrf.mxu0
        %v1523 = vadd.f32 0.0, %v1522
        %v1524 = vpop.f32.mrf.mxu0
        %v1525 = vadd.f32 0.0, %v1524
        %1526 = vdwg.mxu0
        %v1527 = vunpack.c.l.b16 %v1338
        %v1528 = vunpack.c.l.b16 %v1410
        %v1529 = vpack.c.b16 %v1528, %v1527
        %v1530 = vunpack.c.l.b16 %v1362
        %v1531 = vunpack.c.l.b16 %v1434
        %v1532 = vpack.c.b16 %v1531, %v1530
        %v1534 = vsel %vm1480, %v1529, 0
        %v1537 = vsel %vm1480, %v1532, 0
        %1539 = vmatpush.bf16.xpose.msra.mxu0 0
        %1540 = vmatpush.bf16.xpose.msra.mxu0 0
        %1541 = vmatpush.bf16.xpose.msra.mxu0 0
        %1542 = vmatpush.bf16.xpose.msra.mxu0 0
        %1543 = vmatpush.bf16.xpose.msra.mxu0 0
        %1544 = vmatpush.bf16.xpose.msra.mxu0 0
        %1545 = vmatpush.bf16.xpose.msra.mxu0 0
        %1546 = vmatpush.bf16.xpose.msra.mxu0 %v1537
        %1547 = vmatmul.bf16.gmra.mxu0 %v1534
        %v1548 = vpop.f32.mrf.mxu0
        %v1549 = vadd.f32 0.0, %v1548
        %v1550 = vpop.f32.mrf.mxu0
        %v1551 = vadd.f32 0.0, %v1550
        %1552 = vdwg.mxu0
        %v1553 = vunpack.c.l.b16 %v1341
        %v1554 = vunpack.c.l.b16 %v1413
        %v1555 = vpack.c.b16 %v1554, %v1553
        %v1556 = vunpack.c.l.b16 %v1365
        %v1557 = vunpack.c.l.b16 %v1437
        %v1558 = vpack.c.b16 %v1557, %v1556
        %v1560 = vsel %vm1480, %v1555, 0
        %v1563 = vsel %vm1480, %v1558, 0
        %1565 = vmatpush.bf16.xpose.msra.mxu0 0
        %1566 = vmatpush.bf16.xpose.msra.mxu0 0
        %1567 = vmatpush.bf16.xpose.msra.mxu0 0
        %1568 = vmatpush.bf16.xpose.msra.mxu0 0
        %1569 = vmatpush.bf16.xpose.msra.mxu0 0
        %1570 = vmatpush.bf16.xpose.msra.mxu0 0
        %1571 = vmatpush.bf16.xpose.msra.mxu0 0
        %1572 = vmatpush.bf16.xpose.msra.mxu0 %v1563
        %1573 = vmatmul.bf16.gmra.mxu0 %v1560
        %v1574 = vpop.f32.mrf.mxu0
        %v1575 = vadd.f32 0.0, %v1574
        %v1576 = vpop.f32.mrf.mxu0
        %v1577 = vadd.f32 0.0, %v1576
        %1578 = vdwg.mxu0
        %v1579 = vunpack.c.l.b16 %v1344
        %v1580 = vunpack.c.l.b16 %v1416
        %v1581 = vpack.c.b16 %v1580, %v1579
        %v1582 = vunpack.c.l.b16 %v1368
        %v1583 = vunpack.c.l.b16 %v1440
        %v1584 = vpack.c.b16 %v1583, %v1582
        %v1586 = vsel %vm1480, %v1581, 0
        %v1589 = vsel %vm1480, %v1584, 0
        %1591 = vmatpush.bf16.xpose.msra.mxu0 0
        %1592 = vmatpush.bf16.xpose.msra.mxu0 0
        %1593 = vmatpush.bf16.xpose.msra.mxu0 0
        %1594 = vmatpush.bf16.xpose.msra.mxu0 0
        %1595 = vmatpush.bf16.xpose.msra.mxu0 0
        %1596 = vmatpush.bf16.xpose.msra.mxu0 0
        %1597 = vmatpush.bf16.xpose.msra.mxu0 0
        %1598 = vmatpush.bf16.xpose.msra.mxu0 %v1589
        %1599 = vmatmul.bf16.gmra.mxu0 %v1586
        %v1600 = vpop.f32.mrf.mxu0
        %v1601 = vadd.f32 0.0, %v1600
        %v1602 = vpop.f32.mrf.mxu0
        %v1603 = vadd.f32 0.0, %v1602
        %1604 = vdwg.mxu0
        %v1605 = vunpack.c.l.b16 %v1347
        %v1606 = vunpack.c.l.b16 %v1419
        %v1607 = vpack.c.b16 %v1606, %v1605
        %v1608 = vunpack.c.l.b16 %v1371
        %v1609 = vunpack.c.l.b16 %v1443
        %v1610 = vpack.c.b16 %v1609, %v1608
        %v1612 = vsel %vm1480, %v1607, 0
        %v1615 = vsel %vm1480, %v1610, 0
        %1617 = vmatpush.bf16.xpose.msra.mxu0 0
        %1618 = vmatpush.bf16.xpose.msra.mxu0 0
        %1619 = vmatpush.bf16.xpose.msra.mxu0 0
        %1620 = vmatpush.bf16.xpose.msra.mxu0 0
        %1621 = vmatpush.bf16.xpose.msra.mxu0 0
        %1622 = vmatpush.bf16.xpose.msra.mxu0 0
        %1623 = vmatpush.bf16.xpose.msra.mxu0 0
        %1624 = vmatpush.bf16.xpose.msra.mxu0 %v1615
        %1625 = vmatmul.bf16.gmra.mxu0 %v1612
        %v1626 = vpop.f32.mrf.mxu0
        %v1627 = vadd.f32 0.0, %v1626
        %v1628 = vpop.f32.mrf.mxu0
        %v1629 = vadd.f32 0.0, %v1628
        %1630 = vdwg.mxu0
        %v1631 = vunpack.c.l.b16 %v1350
        %v1632 = vunpack.c.l.b16 %v1422
        %v1633 = vpack.c.b16 %v1632, %v1631
        %v1634 = vunpack.c.l.b16 %v1374
        %v1635 = vunpack.c.l.b16 %v1446
        %v1636 = vpack.c.b16 %v1635, %v1634
        %v1638 = vsel %vm1480, %v1633, 0
        %v1641 = vsel %vm1480, %v1636, 0
        %1643 = vmatpush.bf16.xpose.msra.mxu0 0
        %1644 = vmatpush.bf16.xpose.msra.mxu0 0
        %1645 = vmatpush.bf16.xpose.msra.mxu0 0
        %1646 = vmatpush.bf16.xpose.msra.mxu0 0
        %1647 = vmatpush.bf16.xpose.msra.mxu0 0
        %1648 = vmatpush.bf16.xpose.msra.mxu0 0
        %1649 = vmatpush.bf16.xpose.msra.mxu0 0
        %1650 = vmatpush.bf16.xpose.msra.mxu0 %v1641
        %1651 = vmatmul.bf16.gmra.mxu0 %v1638
        %v1652 = vpop.f32.mrf.mxu0
        %v1653 = vadd.f32 0.0, %v1652
        %v1654 = vpop.f32.mrf.mxu0
        %v1655 = vadd.f32 0.0, %v1654
        %1656 = vdwg.mxu0
        %v1657 = vunpack.c.l.b16 %v1353
        %v1658 = vunpack.c.l.b16 %v1425
        %v1659 = vpack.c.b16 %v1658, %v1657
        %v1660 = vunpack.c.l.b16 %v1377
        %v1661 = vunpack.c.l.b16 %v1449
        %v1662 = vpack.c.b16 %v1661, %v1660
        %v1664 = vsel %vm1480, %v1659, 0
        %v1667 = vsel %vm1480, %v1662, 0
        %1669 = vmatpush.bf16.xpose.msra.mxu0 0
        %1670 = vmatpush.bf16.xpose.msra.mxu0 0
        %1671 = vmatpush.bf16.xpose.msra.mxu0 0
        %1672 = vmatpush.bf16.xpose.msra.mxu0 0
        %1673 = vmatpush.bf16.xpose.msra.mxu0 0
        %1674 = vmatpush.bf16.xpose.msra.mxu0 0
        %1675 = vmatpush.bf16.xpose.msra.mxu0 0
        %1676 = vmatpush.bf16.xpose.msra.mxu0 %v1667
        %1677 = vmatmul.bf16.gmra.mxu0 %v1664
        %v1678 = vpop.f32.mrf.mxu0
        %v1679 = vadd.f32 0.0, %v1678
        %v1680 = vpop.f32.mrf.mxu0
        %v1681 = vadd.f32 0.0, %v1680
        %1682 = vdwg.mxu0
        %vm1683 = vcmask 130048
        %v1684 = vsel %vm1683, %v1497, -inf
        %1685 = vmax.xlane.f32.xlu0 %v1684
        %v1686 = vpop.xlane.xlu0 %1685
        %v1687 = vsel %vm1683, %v1499, -inf
        %1688 = vmax.xlane.f32.xlu0 %v1687
        %v1689 = vpop.xlane.xlu0 %1688
        %v1690 = vsel %vm1683, %v1523, -inf
        %1691 = vmax.xlane.f32.xlu0 %v1690
        %v1692 = vpop.xlane.xlu0 %1691
        %v1693 = vsel %vm1683, %v1525, -inf
        %1694 = vmax.xlane.f32.xlu0 %v1693
        %v1695 = vpop.xlane.xlu0 %1694
        %v1696 = vsel %vm1683, %v1549, -inf
        %1697 = vmax.xlane.f32.xlu0 %v1696
        %v1698 = vpop.xlane.xlu0 %1697
        %v1699 = vsel %vm1683, %v1551, -inf
        %1700 = vmax.xlane.f32.xlu0 %v1699
        %v1701 = vpop.xlane.xlu0 %1700
        %v1702 = vsel %vm1683, %v1575, -inf
        %1703 = vmax.xlane.f32.xlu0 %v1702
        %v1704 = vpop.xlane.xlu0 %1703
        %v1705 = vsel %vm1683, %v1577, -inf
        %1706 = vmax.xlane.f32.xlu0 %v1705
        %v1707 = vpop.xlane.xlu0 %1706
        %v1708 = vsel %vm1683, %v1601, -inf
        %1709 = vmax.xlane.f32.xlu0 %v1708
        %v1710 = vpop.xlane.xlu0 %1709
        %v1711 = vsel %vm1683, %v1603, -inf
        %1712 = vmax.xlane.f32.xlu0 %v1711
        %v1713 = vpop.xlane.xlu0 %1712
        %v1714 = vsel %vm1683, %v1627, -inf
        %1715 = vmax.xlane.f32.xlu0 %v1714
        %v1716 = vpop.xlane.xlu0 %1715
        %v1717 = vsel %vm1683, %v1629, -inf
        %1718 = vmax.xlane.f32.xlu0 %v1717
        %v1719 = vpop.xlane.xlu0 %1718
        %v1720 = vsel %vm1683, %v1653, -inf
        %1721 = vmax.xlane.f32.xlu0 %v1720
        %v1722 = vpop.xlane.xlu0 %1721
        %v1723 = vsel %vm1683, %v1655, -inf
        %1724 = vmax.xlane.f32.xlu0 %v1723
        %v1725 = vpop.xlane.xlu0 %1724
        %v1726 = vsel %vm1683, %v1679, -inf
        %1727 = vmax.xlane.f32.xlu0 %v1726
        %v1728 = vpop.xlane.xlu0 %1727
        %v1729 = vsel %vm1683, %v1681, -inf
        %1730 = vmax.xlane.f32.xlu0 %v1729
        %v1731 = vpop.xlane.xlu0 %1730
        %v1732 = vsub.f32 %v1497, %v1686
        %v1733 = vsub.f32 %v1499, %v1689
        %v1734 = vsub.f32 %v1523, %v1692
        %v1735 = vsub.f32 %v1525, %v1695
        %v1736 = vsub.f32 %v1549, %v1698
        %v1737 = vsub.f32 %v1551, %v1701
        %v1738 = vsub.f32 %v1575, %v1704
        %v1739 = vsub.f32 %v1577, %v1707
        %v1740 = vsub.f32 %v1601, %v1710
        %v1741 = vsub.f32 %v1603, %v1713
        %v1742 = vsub.f32 %v1627, %v1716
        %v1743 = vsub.f32 %v1629, %v1719
        %v1744 = vsub.f32 %v1653, %v1722
        %v1745 = vsub.f32 %v1655, %v1725
        %v1746 = vsub.f32 %v1679, %v1728
        %v1747 = vsub.f32 %v1681, %v1731
        %v1748 = vmul.f32 %v1732, 1.442695
        %v1749 = vpow.pop %v1748
        %v1750 = vmul.f32 %v1733, 1.442695
        %v1751 = vpow.pop %v1750
        %v1752 = vmul.f32 %v1734, 1.442695
        %v1753 = vpow.pop %v1752
        %v1754 = vmul.f32 %v1735, 1.442695
        %v1755 = vpow.pop %v1754
        %v1756 = vmul.f32 %v1736, 1.442695
        %v1757 = vpow.pop %v1756
        %v1758 = vmul.f32 %v1737, 1.442695
        %v1759 = vpow.pop %v1758
        %v1760 = vmul.f32 %v1738, 1.442695
        %v1761 = vpow.pop %v1760
        %v1762 = vmul.f32 %v1739, 1.442695
        %v1763 = vpow.pop %v1762
        %v1764 = vmul.f32 %v1740, 1.442695
        %v1765 = vpow.pop %v1764
        %v1766 = vmul.f32 %v1741, 1.442695
        %v1767 = vpow.pop %v1766
        %v1768 = vmul.f32 %v1742, 1.442695
        %v1769 = vpow.pop %v1768
        %v1770 = vmul.f32 %v1743, 1.442695
        %v1771 = vpow.pop %v1770
        %v1772 = vmul.f32 %v1744, 1.442695
        %v1773 = vpow.pop %v1772
        %v1774 = vmul.f32 %v1745, 1.442695
        %v1775 = vpow.pop %v1774
        %v1776 = vmul.f32 %v1746, 1.442695
        %v1777 = vpow.pop %v1776
        %v1778 = vmul.f32 %v1747, 1.442695
        %v1779 = vpow.pop %v1778
        %v1780 = vsel %vm1683, %v1749, 0.0
        %1781 = vadd.xlane.f32.xlu0 %v1780
        %v1782 = vpop.xlane.xlu0 %1781
        %v1783 = vsel %vm1683, %v1751, 0.0
        %1784 = vadd.xlane.f32.xlu0 %v1783
        %v1785 = vpop.xlane.xlu0 %1784
        %v1786 = vsel %vm1683, %v1753, 0.0
        %1787 = vadd.xlane.f32.xlu0 %v1786
        %v1788 = vpop.xlane.xlu0 %1787
        %v1789 = vsel %vm1683, %v1755, 0.0
        %1790 = vadd.xlane.f32.xlu0 %v1789
        %v1791 = vpop.xlane.xlu0 %1790
        %v1792 = vsel %vm1683, %v1757, 0.0
        %1793 = vadd.xlane.f32.xlu0 %v1792
        %v1794 = vpop.xlane.xlu0 %1793
        %v1795 = vsel %vm1683, %v1759, 0.0
        %1796 = vadd.xlane.f32.xlu0 %v1795
        %v1797 = vpop.xlane.xlu0 %1796
        %v1798 = vsel %vm1683, %v1761, 0.0
        %1799 = vadd.xlane.f32.xlu0 %v1798
        %v1800 = vpop.xlane.xlu0 %1799
        %v1801 = vsel %vm1683, %v1763, 0.0
        %1802 = vadd.xlane.f32.xlu0 %v1801
        %v1803 = vpop.xlane.xlu0 %1802
        %v1804 = vsel %vm1683, %v1765, 0.0
        %1805 = vadd.xlane.f32.xlu0 %v1804
        %v1806 = vpop.xlane.xlu0 %1805
        %v1807 = vsel %vm1683, %v1767, 0.0
        %1808 = vadd.xlane.f32.xlu0 %v1807
        %v1809 = vpop.xlane.xlu0 %1808
        %v1810 = vsel %vm1683, %v1769, 0.0
        %1811 = vadd.xlane.f32.xlu0 %v1810
        %v1812 = vpop.xlane.xlu0 %1811
        %v1813 = vsel %vm1683, %v1771, 0.0
        %1814 = vadd.xlane.f32.xlu0 %v1813
        %v1815 = vpop.xlane.xlu0 %1814
        %v1816 = vsel %vm1683, %v1773, 0.0
        %1817 = vadd.xlane.f32.xlu0 %v1816
        %v1818 = vpop.xlane.xlu0 %1817
        %v1819 = vsel %vm1683, %v1775, 0.0
        %1820 = vadd.xlane.f32.xlu0 %v1819
        %v1821 = vpop.xlane.xlu0 %1820
        %v1822 = vsel %vm1683, %v1777, 0.0
        %1823 = vadd.xlane.f32.xlu0 %v1822
        %v1824 = vpop.xlane.xlu0 %1823
        %v1825 = vsel %vm1683, %v1779, 0.0
        %1826 = vadd.xlane.f32.xlu0 %v1825
        %v1827 = vpop.xlane.xlu0 %1826
        %v1828 = vpack.c.bf16 %v1749, %v1749
        %v1829 = vpack.c.bf16 %v1751, %v1751
        %v1830 = vpack.c.bf16 %v1753, %v1753
        %v1831 = vpack.c.bf16 %v1755, %v1755
        %v1832 = vpack.c.bf16 %v1757, %v1757
        %v1833 = vpack.c.bf16 %v1759, %v1759
        %v1834 = vpack.c.bf16 %v1761, %v1761
        %v1835 = vpack.c.bf16 %v1763, %v1763
        %v1836 = vpack.c.bf16 %v1765, %v1765
        %v1837 = vpack.c.bf16 %v1767, %v1767
        %v1838 = vpack.c.bf16 %v1769, %v1769
        %v1839 = vpack.c.bf16 %v1771, %v1771
        %v1840 = vpack.c.bf16 %v1773, %v1773
        %v1841 = vpack.c.bf16 %v1775, %v1775
        %v1842 = vpack.c.bf16 %v1777, %v1777
        %v1843 = vpack.c.bf16 %v1779, %v1779
        %v1846 = vunpack.c.l.b16 %v1828
        %v1847 = vunpack.c.l.b16 %v1829
        %v1848 = vpack.c.b16 %v1847, %v1846
        %v1849 = vunpack.c.l.b16 %v1380
        %v1850 = vunpack.c.l.b16 %v1452
        %v1851 = vpack.c.b16 %v1850, %v1849
        %v1854 = vsel %vm1683, %v1848, 0
        %1856 = vmatpush.bf16.msra.mxu0 0
        %1857 = vmatpush.bf16.msra.mxu0 0
        %1858 = vmatpush.bf16.msra.mxu0 0
        %1859 = vmatpush.bf16.msra.mxu0 0
        %1860 = vmatpush.bf16.msra.mxu0 0
        %1861 = vmatpush.bf16.msra.mxu0 0
        %1862 = vmatpush.bf16.msra.mxu0 0
        %1863 = vmatpush.bf16.msra.mxu0 %v1851
        %1864 = vmatmul.bf16.gmra.mxu0 %v1854
        %v1865 = vpop.f32.mrf.mxu0
        %v1866 = vadd.f32 0.0, %v1865
        %v1867 = vpop.f32.mrf.mxu0
        %v1868 = vadd.f32 0.0, %v1867
        %1869 = vdwg.mxu0
        %v1872 = vunpack.c.l.b16 %v1830
        %v1873 = vunpack.c.l.b16 %v1831
        %v1874 = vpack.c.b16 %v1873, %v1872
        %v1875 = vunpack.c.l.b16 %v1383
        %v1876 = vunpack.c.l.b16 %v1455
        %v1877 = vpack.c.b16 %v1876, %v1875
        %v1880 = vsel %vm1683, %v1874, 0
        %1882 = vmatpush.bf16.msra.mxu0 0
        %1883 = vmatpush.bf16.msra.mxu0 0
        %1884 = vmatpush.bf16.msra.mxu0 0
        %1885 = vmatpush.bf16.msra.mxu0 0
        %1886 = vmatpush.bf16.msra.mxu0 0
        %1887 = vmatpush.bf16.msra.mxu0 0
        %1888 = vmatpush.bf16.msra.mxu0 0
        %1889 = vmatpush.bf16.msra.mxu0 %v1877
        %1890 = vmatmul.bf16.gmra.mxu0 %v1880
        %v1891 = vpop.f32.mrf.mxu0
        %v1892 = vadd.f32 0.0, %v1891
        %v1893 = vpop.f32.mrf.mxu0
        %v1894 = vadd.f32 0.0, %v1893
        %1895 = vdwg.mxu0
        %v1898 = vunpack.c.l.b16 %v1832
        %v1899 = vunpack.c.l.b16 %v1833
        %v1900 = vpack.c.b16 %v1899, %v1898
        %v1901 = vunpack.c.l.b16 %v1386
        %v1902 = vunpack.c.l.b16 %v1458
        %v1903 = vpack.c.b16 %v1902, %v1901
        %v1906 = vsel %vm1683, %v1900, 0
        %1908 = vmatpush.bf16.msra.mxu0 0
        %1909 = vmatpush.bf16.msra.mxu0 0
        %1910 = vmatpush.bf16.msra.mxu0 0
        %1911 = vmatpush.bf16.msra.mxu0 0
        %1912 = vmatpush.bf16.msra.mxu0 0
        %1913 = vmatpush.bf16.msra.mxu0 0
        %1914 = vmatpush.bf16.msra.mxu0 0
        %1915 = vmatpush.bf16.msra.mxu0 %v1903
        %1916 = vmatmul.bf16.gmra.mxu0 %v1906
        %v1917 = vpop.f32.mrf.mxu0
        %v1918 = vadd.f32 0.0, %v1917
        %v1919 = vpop.f32.mrf.mxu0
        %v1920 = vadd.f32 0.0, %v1919
        %1921 = vdwg.mxu0
        %v1924 = vunpack.c.l.b16 %v1834
        %v1925 = vunpack.c.l.b16 %v1835
        %v1926 = vpack.c.b16 %v1925, %v1924
        %v1927 = vunpack.c.l.b16 %v1389
        %v1928 = vunpack.c.l.b16 %v1461
        %v1929 = vpack.c.b16 %v1928, %v1927
        %v1932 = vsel %vm1683, %v1926, 0
        %1934 = vmatpush.bf16.msra.mxu0 0
        %1935 = vmatpush.bf16.msra.mxu0 0
        %1936 = vmatpush.bf16.msra.mxu0 0
        %1937 = vmatpush.bf16.msra.mxu0 0
        %1938 = vmatpush.bf16.msra.mxu0 0
        %1939 = vmatpush.bf16.msra.mxu0 0
        %1940 = vmatpush.bf16.msra.mxu0 0
        %1941 = vmatpush.bf16.msra.mxu0 %v1929
        %1942 = vmatmul.bf16.gmra.mxu0 %v1932
        %v1943 = vpop.f32.mrf.mxu0
        %v1944 = vadd.f32 0.0, %v1943
        %v1945 = vpop.f32.mrf.mxu0
        %v1946 = vadd.f32 0.0, %v1945
        %1947 = vdwg.mxu0
        %v1950 = vunpack.c.l.b16 %v1836
        %v1951 = vunpack.c.l.b16 %v1837
        %v1952 = vpack.c.b16 %v1951, %v1950
        %v1953 = vunpack.c.l.b16 %v1392
        %v1954 = vunpack.c.l.b16 %v1464
        %v1955 = vpack.c.b16 %v1954, %v1953
        %v1958 = vsel %vm1683, %v1952, 0
        %1960 = vmatpush.bf16.msra.mxu0 0
        %1961 = vmatpush.bf16.msra.mxu0 0
        %1962 = vmatpush.bf16.msra.mxu0 0
        %1963 = vmatpush.bf16.msra.mxu0 0
        %1964 = vmatpush.bf16.msra.mxu0 0
        %1965 = vmatpush.bf16.msra.mxu0 0
        %1966 = vmatpush.bf16.msra.mxu0 0
        %1967 = vmatpush.bf16.msra.mxu0 %v1955
        %1968 = vmatmul.bf16.gmra.mxu0 %v1958
        %v1969 = vpop.f32.mrf.mxu0
        %v1970 = vadd.f32 0.0, %v1969
        %v1971 = vpop.f32.mrf.mxu0
        %v1972 = vadd.f32 0.0, %v1971
        %1973 = vdwg.mxu0
        %v1976 = vunpack.c.l.b16 %v1838
        %v1977 = vunpack.c.l.b16 %v1839
        %v1978 = vpack.c.b16 %v1977, %v1976
        %v1979 = vunpack.c.l.b16 %v1395
        %v1980 = vunpack.c.l.b16 %v1467
        %v1981 = vpack.c.b16 %v1980, %v1979
        %v1984 = vsel %vm1683, %v1978, 0
        %1986 = vmatpush.bf16.msra.mxu0 0
        %1987 = vmatpush.bf16.msra.mxu0 0
        %1988 = vmatpush.bf16.msra.mxu0 0
        %1989 = vmatpush.bf16.msra.mxu0 0
        %1990 = vmatpush.bf16.msra.mxu0 0
        %1991 = vmatpush.bf16.msra.mxu0 0
        %1992 = vmatpush.bf16.msra.mxu0 0
        %1993 = vmatpush.bf16.msra.mxu0 %v1981
        %1994 = vmatmul.bf16.gmra.mxu0 %v1984
        %v1995 = vpop.f32.mrf.mxu0
        %v1996 = vadd.f32 0.0, %v1995
        %v1997 = vpop.f32.mrf.mxu0
        %v1998 = vadd.f32 0.0, %v1997
        %1999 = vdwg.mxu0
        %v2002 = vunpack.c.l.b16 %v1840
        %v2003 = vunpack.c.l.b16 %v1841
        %v2004 = vpack.c.b16 %v2003, %v2002
        %v2005 = vunpack.c.l.b16 %v1398
        %v2006 = vunpack.c.l.b16 %v1470
        %v2007 = vpack.c.b16 %v2006, %v2005
        %v2010 = vsel %vm1683, %v2004, 0
        %2012 = vmatpush.bf16.msra.mxu0 0
        %2013 = vmatpush.bf16.msra.mxu0 0
        %2014 = vmatpush.bf16.msra.mxu0 0
        %2015 = vmatpush.bf16.msra.mxu0 0
        %2016 = vmatpush.bf16.msra.mxu0 0
        %2017 = vmatpush.bf16.msra.mxu0 0
        %2018 = vmatpush.bf16.msra.mxu0 0
        %2019 = vmatpush.bf16.msra.mxu0 %v2007
        %2020 = vmatmul.bf16.gmra.mxu0 %v2010
        %v2021 = vpop.f32.mrf.mxu0
        %v2022 = vadd.f32 0.0, %v2021
        %v2023 = vpop.f32.mrf.mxu0
        %v2024 = vadd.f32 0.0, %v2023
        %2025 = vdwg.mxu0
        %v2028 = vunpack.c.l.b16 %v1842
        %v2029 = vunpack.c.l.b16 %v1843
        %v2030 = vpack.c.b16 %v2029, %v2028
        %v2031 = vunpack.c.l.b16 %v1401
        %v2032 = vunpack.c.l.b16 %v1473
        %v2033 = vpack.c.b16 %v2032, %v2031
        %v2036 = vsel %vm1683, %v2030, 0
        %2038 = vmatpush.bf16.msra.mxu0 0
        %2039 = vmatpush.bf16.msra.mxu0 0
        %2040 = vmatpush.bf16.msra.mxu0 0
        %2041 = vmatpush.bf16.msra.mxu0 0
        %2042 = vmatpush.bf16.msra.mxu0 0
        %2043 = vmatpush.bf16.msra.mxu0 0
        %2044 = vmatpush.bf16.msra.mxu0 0
        %2045 = vmatpush.bf16.msra.mxu0 %v2033
        %2046 = vmatmul.bf16.gmra.mxu0 %v2036
        %v2047 = vpop.f32.mrf.mxu0
        %v2048 = vadd.f32 0.0, %v2047
        %v2049 = vpop.f32.mrf.mxu0
        %v2050 = vadd.f32 0.0, %v2049
        %2051 = vdwg.mxu0
        %v2052 = vrcp.pop %v1782
        %v2053 = vrcp.pop %v1785
        %v2054 = vrcp.pop %v1788
        %v2055 = vrcp.pop %v1791
        %v2056 = vrcp.pop %v1794
        %v2057 = vrcp.pop %v1797
        %v2058 = vrcp.pop %v1800
        %v2059 = vrcp.pop %v1803
        %v2060 = vrcp.pop %v1806
        %v2061 = vrcp.pop %v1809
        %v2062 = vrcp.pop %v1812
        %v2063 = vrcp.pop %v1815
        %v2064 = vrcp.pop %v1818
        %v2065 = vrcp.pop %v1821
        %v2066 = vrcp.pop %v1824
        %v2067 = vrcp.pop %v1827
        %v2068 = vmul.f32 %v1866, %v2052
        %v2069 = vmul.f32 %v1868, %v2053
        %v2070 = vmul.f32 %v1892, %v2054
        %v2071 = vmul.f32 %v1894, %v2055
        %v2072 = vmul.f32 %v1918, %v2056
        %v2073 = vmul.f32 %v1920, %v2057
        %v2074 = vmul.f32 %v1944, %v2058
        %v2075 = vmul.f32 %v1946, %v2059
        %v2076 = vmul.f32 %v1970, %v2060
        %v2077 = vmul.f32 %v1972, %v2061
        %v2078 = vmul.f32 %v1996, %v2062
        %v2079 = vmul.f32 %v1998, %v2063
        %v2080 = vmul.f32 %v2022, %v2064
        %v2081 = vmul.f32 %v2024, %v2065
        %v2082 = vmul.f32 %v2048, %v2066
        %v2083 = vmul.f32 %v2050, %v2067
        %v2084 = vpack.c.bf16 %v2068, %v2068
        %v2085 = vpack.c.bf16 %v2069, %v2069
        %v2086 = vpack.c.bf16 %v2070, %v2070
        %v2087 = vpack.c.bf16 %v2071, %v2071
        %v2088 = vpack.c.bf16 %v2072, %v2072
        %v2089 = vpack.c.bf16 %v2073, %v2073
        %v2090 = vpack.c.bf16 %v2074, %v2074
        %v2091 = vpack.c.bf16 %v2075, %v2075
        %v2092 = vpack.c.bf16 %v2076, %v2076
        %v2093 = vpack.c.bf16 %v2077, %v2077
        %v2094 = vpack.c.bf16 %v2078, %v2078
        %v2095 = vpack.c.bf16 %v2079, %v2079
        %v2096 = vpack.c.bf16 %v2080, %v2080
        %v2097 = vpack.c.bf16 %v2081, %v2081
        %v2098 = vpack.c.bf16 %v2082, %v2082
        %v2099 = vpack.c.bf16 %v2083, %v2083
        %v2100 = vrot.slane %v2092, 4
        %v2101 = vsel %vm466, %v2100, %v2084
        %v2103 = vunpack.c.l.s4 1983009808
        %v2104 = vunpack.c.0.s8 %v2103
        %v2105 = vperm.slane %v2101, %v2104
        %v2106 = vrot.slane %v2096, 4
        %v2107 = vsel %vm466, %v2106, %v2088
        %v2109 = vunpack.c.l.s4 1983009808
        %v2110 = vunpack.c.0.s8 %v2109
        %v2111 = vperm.slane %v2107, %v2110
        %v2112 = vrot.slane %v2111, 4
        %v2113 = vsel %vm466, %v2112, %v2105
        %v2114 = vrot.slane %v2105, 4
        %v2115 = vsel %vm466, %v2111, %v2114
        %v2117 = vunpack.c.l.s4 1934713408
        %v2118 = vunpack.c.0.s8 %v2117
        %v2119 = vperm.slane %v2113, %v2118
        %v2121 = vunpack.c.l.s4 1934713408
        %v2122 = vunpack.c.0.s8 %v2121
        %v2123 = vperm.slane %v2115, %v2122
        %v2124 = vrot.slane %v2119, 4
        %v2125 = vsel %vm466, 0, %v2124
        %v2126 = vrot.slane %v2123, 4
        %v2127 = vsel %vm466, 0, %v2126
        %v2128 = vrot.slane %v2094, 4
        %v2129 = vsel %vm466, %v2128, %v2086
        %v2131 = vunpack.c.l.s4 1983009808
        %v2132 = vunpack.c.0.s8 %v2131
        %v2133 = vperm.slane %v2129, %v2132
        %v2134 = vrot.slane %v2098, 4
        %v2135 = vsel %vm466, %v2134, %v2090
        %v2137 = vunpack.c.l.s4 1983009808
        %v2138 = vunpack.c.0.s8 %v2137
        %v2139 = vperm.slane %v2135, %v2138
        %v2140 = vrot.slane %v2139, 4
        %v2141 = vsel %vm466, %v2140, %v2133
        %v2142 = vrot.slane %v2133, 4
        %v2143 = vsel %vm466, %v2139, %v2142
        %v2145 = vunpack.c.l.s4 1934713408
        %v2146 = vunpack.c.0.s8 %v2145
        %v2147 = vperm.slane %v2141, %v2146
        %v2149 = vunpack.c.l.s4 1934713408
        %v2150 = vunpack.c.0.s8 %v2149
        %v2151 = vperm.slane %v2143, %v2150
        %v2152 = vrot.slane %v2147, 4
        %v2153 = vsel %vm466, 0, %v2152
        %v2154 = vrot.slane %v2151, 4
        %v2155 = vsel %vm466, 0, %v2154
        %v2156 = vrot.slane %v2093, 4
        %v2157 = vsel %vm466, %v2156, %v2085
        %v2159 = vunpack.c.l.s4 1983009808
        %v2160 = vunpack.c.0.s8 %v2159
        %v2161 = vperm.slane %v2157, %v2160
        %v2162 = vrot.slane %v2097, 4
        %v2163 = vsel %vm466, %v2162, %v2089
        %v2165 = vunpack.c.l.s4 1983009808
        %v2166 = vunpack.c.0.s8 %v2165
        %v2167 = vperm.slane %v2163, %v2166
        %v2168 = vrot.slane %v2167, 4
        %v2169 = vsel %vm466, %v2168, %v2161
        %v2170 = vrot.slane %v2161, 4
        %v2171 = vsel %vm466, %v2167, %v2170
        %v2173 = vunpack.c.l.s4 1934713408
        %v2174 = vunpack.c.0.s8 %v2173
        %v2175 = vperm.slane %v2169, %v2174
        %v2177 = vunpack.c.l.s4 1934713408
        %v2178 = vunpack.c.0.s8 %v2177
        %v2179 = vperm.slane %v2171, %v2178
        %v2180 = vrot.slane %v2175, 4
        %v2181 = vsel %vm466, 0, %v2180
        %v2182 = vrot.slane %v2179, 4
        %v2183 = vsel %vm466, 0, %v2182
        %v2184 = vrot.slane %v2095, 4
        %v2185 = vsel %vm466, %v2184, %v2087
        %v2187 = vunpack.c.l.s4 1983009808
        %v2188 = vunpack.c.0.s8 %v2187
        %v2189 = vperm.slane %v2185, %v2188
        %v2190 = vrot.slane %v2099, 4
        %v2191 = vsel %vm466, %v2190, %v2091
        %v2193 = vunpack.c.l.s4 1983009808
        %v2194 = vunpack.c.0.s8 %v2193
        %v2195 = vperm.slane %v2191, %v2194
        %v2196 = vrot.slane %v2195, 4
        %v2197 = vsel %vm466, %v2196, %v2189
        %v2198 = vrot.slane %v2189, 4
        %v2199 = vsel %vm466, %v2195, %v2198
        %v2201 = vunpack.c.l.s4 1934713408
        %v2202 = vunpack.c.0.s8 %v2201
        %v2203 = vperm.slane %v2197, %v2202
        %v2205 = vunpack.c.l.s4 1934713408
        %v2206 = vunpack.c.0.s8 %v2205
        %v2207 = vperm.slane %v2199, %v2206
        %v2208 = vrot.slane %v2203, 4
        %v2209 = vsel %vm466, 0, %v2208
        %v2210 = vrot.slane %v2207, 4
        %v2211 = vsel %vm466, 0, %v2210
        %v2214 = vpack.i.b16 %v2147, %v2119
        %v2216 = vshrl.u32 %v2119, 16
        %v2217 = vshrl.u32 %v2147, 16
        %v2218 = vpack.i.b16 %v2217, %v2216
        %v2222 = vpack.i.b16 %v2153, %v2125
        %v2224 = vshrl.u32 %v2125, 16
        %v2225 = vshrl.u32 %v2153, 16
        %v2226 = vpack.i.b16 %v2225, %v2224
        %v2230 = vpack.i.b16 %v2151, %v2123
        %v2232 = vshrl.u32 %v2123, 16
        %v2233 = vshrl.u32 %v2151, 16
        %v2234 = vpack.i.b16 %v2233, %v2232
        %v2238 = vpack.i.b16 %v2155, %v2127
        %v2240 = vshrl.u32 %v2127, 16
        %v2241 = vshrl.u32 %v2155, 16
        %v2242 = vpack.i.b16 %v2241, %v2240
        %v2246 = vpack.i.b16 %v2203, %v2175
        %v2248 = vshrl.u32 %v2175, 16
        %v2249 = vshrl.u32 %v2203, 16
        %v2250 = vpack.i.b16 %v2249, %v2248
        %v2254 = vpack.i.b16 %v2209, %v2181
        %v2256 = vshrl.u32 %v2181, 16
        %v2257 = vshrl.u32 %v2209, 16
        %v2258 = vpack.i.b16 %v2257, %v2256
        %v2262 = vpack.i.b16 %v2207, %v2179
        %v2264 = vshrl.u32 %v2179, 16
        %v2265 = vshrl.u32 %v2207, 16
        %v2266 = vpack.i.b16 %v2265, %v2264
        %v2270 = vpack.i.b16 %v2211, %v2183
        %v2272 = vshrl.u32 %v2183, 16
        %v2273 = vshrl.u32 %v2211, 16
        %v2274 = vpack.i.b16 %v2273, %v2272
        %v2276 = vrot.slane %v2230, 4
        %v2277 = vsel %vm466, %v2276, %v2214
        %v2279 = vunpack.c.l.s4 1983009808
        %v2280 = vunpack.c.0.s8 %v2279
        %v2281 = vperm.slane %v2277, %v2280
        %v2282 = vrot.slane %v2238, 4
        %v2283 = vsel %vm466, %v2282, %v2222
        %v2285 = vunpack.c.l.s4 1983009808
        %v2286 = vunpack.c.0.s8 %v2285
        %v2287 = vperm.slane %v2283, %v2286
        %v2288 = vrot.slane %v2287, 4
        %v2289 = vsel %vm466, %v2288, %v2281
        %v2290 = vrot.slane %v2281, 4
        %v2291 = vsel %vm466, %v2287, %v2290
        %v2293 = vunpack.c.l.s4 1934713408
        %v2294 = vunpack.c.0.s8 %v2293
        %v2295 = vperm.slane %v2289, %v2294
        %v2297 = vunpack.c.l.s4 1934713408
        %v2298 = vunpack.c.0.s8 %v2297
        %v2299 = vperm.slane %v2291, %v2298
        %v2300 = vrot.slane %v2295, 4
        %v2301 = vsel %vm466, 0, %v2300
        %v2302 = vrot.slane %v2299, 4
        %v2303 = vsel %vm466, 0, %v2302
        %v2304 = vrot.slane %v2234, 4
        %v2305 = vsel %vm466, %v2304, %v2218
        %v2307 = vunpack.c.l.s4 1983009808
        %v2308 = vunpack.c.0.s8 %v2307
        %v2309 = vperm.slane %v2305, %v2308
        %v2310 = vrot.slane %v2242, 4
        %v2311 = vsel %vm466, %v2310, %v2226
        %v2313 = vunpack.c.l.s4 1983009808
        %v2314 = vunpack.c.0.s8 %v2313
        %v2315 = vperm.slane %v2311, %v2314
        %v2316 = vrot.slane %v2315, 4
        %v2317 = vsel %vm466, %v2316, %v2309
        %v2318 = vrot.slane %v2309, 4
        %v2319 = vsel %vm466, %v2315, %v2318
        %v2321 = vunpack.c.l.s4 1934713408
        %v2322 = vunpack.c.0.s8 %v2321
        %v2323 = vperm.slane %v2317, %v2322
        %v2325 = vunpack.c.l.s4 1934713408
        %v2326 = vunpack.c.0.s8 %v2325
        %v2327 = vperm.slane %v2319, %v2326
        %v2328 = vrot.slane %v2323, 4
        %v2329 = vsel %vm466, 0, %v2328
        %v2330 = vrot.slane %v2327, 4
        %v2331 = vsel %vm466, 0, %v2330
        %v2332 = vrot.slane %v2262, 4
        %v2333 = vsel %vm466, %v2332, %v2246
        %v2335 = vunpack.c.l.s4 1983009808
        %v2336 = vunpack.c.0.s8 %v2335
        %v2337 = vperm.slane %v2333, %v2336
        %v2338 = vrot.slane %v2270, 4
        %v2339 = vsel %vm466, %v2338, %v2254
        %v2341 = vunpack.c.l.s4 1983009808
        %v2342 = vunpack.c.0.s8 %v2341
        %v2343 = vperm.slane %v2339, %v2342
        %v2344 = vrot.slane %v2343, 4
        %v2345 = vsel %vm466, %v2344, %v2337
        %v2346 = vrot.slane %v2337, 4
        %v2347 = vsel %vm466, %v2343, %v2346
        %v2349 = vunpack.c.l.s4 1934713408
        %v2350 = vunpack.c.0.s8 %v2349
        %v2351 = vperm.slane %v2345, %v2350
        %v2353 = vunpack.c.l.s4 1934713408
        %v2354 = vunpack.c.0.s8 %v2353
        %v2355 = vperm.slane %v2347, %v2354
        %v2356 = vrot.slane %v2351, 4
        %v2357 = vsel %vm466, 0, %v2356
        %v2358 = vrot.slane %v2355, 4
        %v2359 = vsel %vm466, 0, %v2358
        %v2360 = vrot.slane %v2266, 4
        %v2361 = vsel %vm466, %v2360, %v2250
        %v2363 = vunpack.c.l.s4 1983009808
        %v2364 = vunpack.c.0.s8 %v2363
        %v2365 = vperm.slane %v2361, %v2364
        %v2366 = vrot.slane %v2274, 4
        %v2367 = vsel %vm466, %v2366, %v2258
        %v2369 = vunpack.c.l.s4 1983009808
        %v2370 = vunpack.c.0.s8 %v2369
        %v2371 = vperm.slane %v2367, %v2370
        %v2372 = vrot.slane %v2371, 4
        %v2373 = vsel %vm466, %v2372, %v2365
        %v2374 = vrot.slane %v2365, 4
        %v2375 = vsel %vm466, %v2371, %v2374
        %v2377 = vunpack.c.l.s4 1934713408
        %v2378 = vunpack.c.0.s8 %v2377
        %v2379 = vperm.slane %v2373, %v2378
        %v2381 = vunpack.c.l.s4 1934713408
        %v2382 = vunpack.c.0.s8 %v2381
        %v2383 = vperm.slane %v2375, %v2382
        %v2384 = vrot.slane %v2379, 4
        %v2385 = vsel %vm466, 0, %v2384
        %v2386 = vrot.slane %v2383, 4
        %v2387 = vsel %vm466, 0, %v2386
        %v2390 = vpack.i.b16 %v2323, %v2295
        %v2391 = vshrl.u32 %v2295, 16
        %v2392 = vshrl.u32 %v2323, 16
        %v2393 = vpack.i.b16 %v2392, %v2391
        %v2396 = vpack.i.b16 %v2329, %v2301
        %v2397 = vshrl.u32 %v2301, 16
        %v2398 = vshrl.u32 %v2329, 16
        %v2399 = vpack.i.b16 %v2398, %v2397
        %v2402 = vpack.i.b16 %v2327, %v2299
        %v2403 = vshrl.u32 %v2299, 16
        %v2404 = vshrl.u32 %v2327, 16
        %v2405 = vpack.i.b16 %v2404, %v2403
        %v2408 = vpack.i.b16 %v2331, %v2303
        %v2409 = vshrl.u32 %v2303, 16
        %v2410 = vshrl.u32 %v2331, 16
        %v2411 = vpack.i.b16 %v2410, %v2409
        %v2414 = vpack.i.b16 %v2379, %v2351
        %v2415 = vshrl.u32 %v2351, 16
        %v2416 = vshrl.u32 %v2379, 16
        %v2417 = vpack.i.b16 %v2416, %v2415
        %v2420 = vpack.i.b16 %v2385, %v2357
        %v2421 = vshrl.u32 %v2357, 16
        %v2422 = vshrl.u32 %v2385, 16
        %v2423 = vpack.i.b16 %v2422, %v2421
        %v2426 = vpack.i.b16 %v2383, %v2355
        %v2427 = vshrl.u32 %v2355, 16
        %v2428 = vshrl.u32 %v2383, 16
        %v2429 = vpack.i.b16 %v2428, %v2427
        %v2432 = vpack.i.b16 %v2387, %v2359
        %v2433 = vshrl.u32 %v2359, 16
        %v2434 = vshrl.u32 %v2387, 16
        %v2435 = vpack.i.b16 %v2434, %v2433
        %v2436 = vunpack.c.l.b16 %v2390
        %v2437 = vunpack.c.l.b16 %v2414
        %v2438 = vpack.c.b16 %v2437, %v2436
        %v2439 = vunpack.c.l.b16 %v2393
        %v2440 = vunpack.c.l.b16 %v2417
        %v2441 = vpack.c.b16 %v2440, %v2439
        %2442 = vrot.lane.b32.xlu0 %v2441, 8
        %v2443 = vpop.permute.xlu0 %2442
        %v2444 = vunpack.c.l.b16 %v2396
        %v2445 = vunpack.c.l.b16 %v2420
        %v2446 = vpack.c.b16 %v2445, %v2444
        %2447 = vrot.lane.b32.xlu0 %v2446, 16
        %v2448 = vpop.permute.xlu0 %2447
        %v2449 = vunpack.c.l.b16 %v2399
        %v2450 = vunpack.c.l.b16 %v2423
        %v2451 = vpack.c.b16 %v2450, %v2449
        %2452 = vrot.lane.b32.xlu0 %v2451, 24
        %v2453 = vpop.permute.xlu0 %2452
        %v2454 = vunpack.c.l.b16 %v2402
        %v2455 = vunpack.c.l.b16 %v2426
        %v2456 = vpack.c.b16 %v2455, %v2454
        %2457 = vrot.lane.b32.xlu0 %v2456, 32
        %v2458 = vpop.permute.xlu0 %2457
        %v2459 = vunpack.c.l.b16 %v2405
        %v2460 = vunpack.c.l.b16 %v2429
        %v2461 = vpack.c.b16 %v2460, %v2459
        %2462 = vrot.lane.b32.xlu0 %v2461, 40
        %v2463 = vpop.permute.xlu0 %2462
        %v2464 = vunpack.c.l.b16 %v2408
        %v2465 = vunpack.c.l.b16 %v2432
        %v2466 = vpack.c.b16 %v2465, %v2464
        %2467 = vrot.lane.b32.xlu0 %v2466, 48
        %v2468 = vpop.permute.xlu0 %2467
        %v2469 = vunpack.c.l.b16 %v2411
        %v2470 = vunpack.c.l.b16 %v2435
        %v2471 = vpack.c.b16 %v2470, %v2469
        %2472 = vrot.lane.b32.xlu0 %v2471, 56
        %v2473 = vpop.permute.xlu0 %2472
        %v2476 = vsel %vm1480, %v2438, %v2443
        %v2478 = vsel %vm1683, %v2476, %v2448
        %vm2479 = vcmask 195584
        %v2481 = vsel %vm2479, %v2478, %v2453
        %vm2482 = vcmask 261120
        %v2484 = vsel %vm2482, %v2481, %v2458
        %vm2485 = vcmask 326656
        %v2487 = vsel %vm2485, %v2484, %v2463
        %vm2488 = vcmask 392192
        %v2490 = vsel %vm2488, %v2487, %v2468
        %vm2491 = vcmask 457728
        %v2493 = vsel %vm2491, %v2490, %v2473
        %v2494 = vld [vmem:[#allocation7] sm:$0xf]
        %v2495 = vld [vmem:[#allocation7 + $0x4] sm:$0xf]
        %v2496 = vld [vmem:[#allocation7 + $0x8] sm:$0xf]
        %v2497 = vld [vmem:[#allocation7 + $0xc] sm:$0xf]
        %v2498 = vld [vmem:[#allocation7 + $0x10] sm:$0xf]
        %v2499 = vld [vmem:[#allocation7 + $0x14] sm:$0xf]
        %v2500 = vld [vmem:[#allocation7 + $0x18] sm:$0xf]
        %v2501 = vld [vmem:[#allocation7 + $0x1c] sm:$0xf]
        %v2502 = vld [vmem:[%s3] sm:$0x1]
        %v2504 = vperm.slane %v2502, 0
        %v2514 = vunpack.c.l.b16 %v2494
        %v2515 = vunpack.c.l.b16 %v2495
        %v2516 = vunpack.c.l.b16 %v2496
        %v2517 = vunpack.c.l.b16 %v2497
        %v2518 = vunpack.c.l.b16 %v2498
        %v2519 = vunpack.c.l.b16 %v2499
        %v2520 = vunpack.c.l.b16 %v2500
        %v2521 = vunpack.c.l.b16 %v2501
        %v2522 = vpack.c.b16 %v2515, %v2514
        %v2523 = vpack.c.b16 %v2517, %v2516
        %v2524 = vpack.c.b16 %v2519, %v2518
        %v2525 = vpack.c.b16 %v2521, %v2520
        %v2530 = vsel %vm307, %v2493, 0
        %2532 = vmatpush.bf16.msra.mxu0 0
        %2533 = vmatpush.bf16.msra.mxu0 0
        %2534 = vmatpush.bf16.msra.mxu0 0
        %2535 = vmatpush.bf16.msra.mxu0 0
        %2536 = vmatpush.bf16.msra.mxu0 %v2525
        %2537 = vmatpush.bf16.msra.mxu0 %v2524
        %2538 = vmatpush.bf16.msra.mxu0 %v2523
        %2539 = vmatpush.bf16.msra.mxu0 %v2522
        %2540 = vmatmul.bf16.gmra.mxu0 %v2530
        %v2541 = vpop.f32.mrf.mxu0
        %v2542 = vadd.f32 %v2504, %v2541
        %v2543 = vpop.f32.mrf.mxu0
        %v2544 = vadd.f32 %v2504, %v2543
        %2545 = vdwg.mxu0
        %2546 = vst.msk [vmem:[%s250] sm:$0xff] %vm307, %v2542
        %2547 = vst.msk [vmem:[%s250 + $0x8] sm:$0xff] %vm307, %v2544
        %s2548 = sand.u32 %s119, 1
        %s2549 = scalar_lea.sflag [#allocation4], %s2548
        %s2550 = sand.u32 %s119, 1
        %s2551 = smul.addr %s2550, 16
        %s2552 = scalar_lea.vmem [#allocation8], %s2551
        // Predicated region
        $region49: #{tpu_custom_call.1} parent=35 // pred_check
          %p2553 = pneg %p129
        $region50: #{tpu_custom_call.1} parent=35 // pred_check_branch
          %2555 = sbr.rel (%p2553) target = $region52
        $region51: #{tpu_custom_call.1} parent=35 // pred_region
          %2557 = vsyncadd %s2549, 0
          %s2558 = smul.addr %s22, 2
          %s2559 = smul.addr %s2558, 8
          %s2560 = scalar_lea.hbm %s4, %s2559
          %s2561 = sshll.u32 %s2552, 4
          %s2562 = int_to_ptr.vmem [resolvable:$true] %s2561
          %s2563 = sshll.u32 %s2560, 4
          %s2564 = int_to_ptr.hbm [resolvable:$true] %s2563
          %2569 = dma.vmem_to_hbm [thread:$0]  %s2562, 256, %s2564, %s2549, 128, 128, 8
        $region52: #{tpu_custom_call.1} parent=35 // pred_fallthru
          _
      $region36: #{tpu_custom_call.1} parent=5 // pred_fallthru
        _
      %p2570 = scmp.le.s32.totalorder 2, %s17
      // Predicated region
      $region53: #{tpu_custom_call.1} parent=5 // pred_check
        %p2571 = pneg %p2570
      $region54: #{tpu_custom_call.1} parent=5 // pred_check_branch
        %2573 = sbr.rel (%p2571) target = $region56
      $region55: #{tpu_custom_call.1} parent=5 // pred_region
        %s2574 = ssub.s32 %s17, 2
        // Predicated region
        $region57: #{tpu_custom_call.1} parent=55 // pred_check
          %p2575 = pneg %p135
        $region58: #{tpu_custom_call.1} parent=55 // pred_check_branch
          %2577 = sbr.rel (%p2575) target = $region60
        $region59: #{tpu_custom_call.1} parent=55 // pred_region
          %s2578 = sand.u32 %s120, 1
          %s2579 = scalar_lea.sflag [#allocation4], %s2578
          %s2580 = sand.u32 %s120, 1
          %s2581 = smul.addr %s2580, 16
          %s2582 = scalar_lea.vmem [#allocation8], %s2581
          %2584 = dma.done %s2579, 256
        $region60: #{tpu_custom_call.1} parent=55 // pred_fallthru
          _
      $region56: #{tpu_custom_call.1} parent=5 // pred_fallthru
        _
    $region6: #{tpu_custom_call.1} parent=1 // loop_footer
      %s21 = sadd.s32 1, %s17
    $region7: #{tpu_custom_call.1} parent=1 // loop_footer_branch
      %16 = sbr.rel target = $region3
    $region8: #{tpu_custom_call.1} parent=1 // loop_exit
      _
    %2585 = vsyncpa [#allocation3], 1
    %s2586 = scalar_lea.sflag [#allocation3], 1
    %2587 = vsyncpa %s2586, 1
    %2588 = vsyncpa [#allocation6], 1
    %2589 = vsyncpa [#allocation4], 1
    %s2590 = scalar_lea.sflag [#allocation4], 1
    %2591 = vsyncpa %s2590, 1

</llo_original>
